<compile_context>
chip_gen: v5e
topology: v5e:2x2
jax: 0.10.0
libtpu: 0.0.40
codegen_flags: <defaults>
</compile_context>

<pallas_src>
import jax
import jax.numpy as jnp
from jax import lax
from jax.experimental import pallas as pl
from jax.experimental.pallas import tpu as pltpu

BN_EPS = 1e-5
LANE = 128
VMEM_LIMIT = 32 * 1024 * 1024  # conservative across v5e/v6e (128 MiB) and v7x (64 MiB)


def _round_up(x, m):
    return (x + m - 1) // m * m


def _pick_batch_tile(n, target):
    t = max(1, min(n, target))
    while n % t:
        t -= 1
    return t


def _make_x_index_map(i, s):
    def index_map(nb, ho):
        return (nb, ho * s + i, 0, 0)
    return index_map


def conv_block_forward(x, weight, bias, gamma, beta, *, stride, padding,
                       compute_dtype=jnp.bfloat16, out_dtype=None,
                       channels_last_out=True, batch_tile=8):
    """ConvBlock forward: Conv2d(groups=1) -> BatchNorm2d(train batch stats) -> SiLU.

    x: (N, C_in, H, W); weight: (C_out, C_in, kh, kw); bias/gamma/beta: (C_out,).
    Returns NHWC (default) or NCHW.  `bias` is accepted for API parity but not added:
    a conv bias is exactly cancelled by training-mode BatchNorm, so the ConvBlock
    output is unchanged.
    """
    N, C_in, H, W = x.shape
    C_out, C_in_w, kh, kw = weight.shape
    assert C_in_w == C_in, "groups=1 only"  # TODO(synk): depthwise / grouped conv
    s = int(stride)
    p = int(padding)
    del bias  # mathematically cancelled by training-mode BN

    H_out = (H + 2 * p - kh) // s + 1
    W_out = (W + 2 * p - kw) // s + 1
    H_pad = H + 2 * p
    Wq = -(-(W + 2 * p) // s)        # ceil(W_pad / s): quotient width of the phase split
    P = N * H_out * W_out            # BN population size
    Cp = _round_up(C_out, LANE)      # lane-dense output channels / MXU N dim
    KK = kh * kw * C_in
    if out_dtype is None:
        out_dtype = x.dtype

    TB = _pick_batch_tile(N, batch_tile)
    grid = (N // TB, H_out)

    # ---- Input layout (cheap, x-sized): NCHW -> NHWC, cast FIRST, zero-pad spatially,
    # then split W into (phase, quotient): element [n, h, ph*Wq + q, c] == x_pad[n, h, q*s+ph, c].
    xh = jnp.transpose(x, (0, 2, 3, 1)).astype(compute_dtype)
    xh = jnp.pad(xh, ((0, 0), (p, p), (p, Wq * s - W - p), (0, 0)))
    xq = (xh.reshape(N, H_pad, Wq, s, C_in)
             .transpose(0, 1, 3, 2, 4)
             .reshape(N, H_pad, s * Wq, C_in))

    # ---- Weights: (C_out, C_in, kh, kw) -> (kh*kw*C_in, Cp), tap-major rows.
    w_flat = jnp.transpose(weight, (2, 3, 1, 0)).reshape(KK, C_out)
    w_flat = jnp.pad(w_flat, ((0, 0), (0, Cp - C_out))).astype(compute_dtype)

    # ---- Shared in-kernel conv: one (W_out, Cp) f32 output row per image b of the batch
    # tile, accumulated over kh*kw taps as small MXU matmuls (kernel is HBM-bound, so MXU
    # under-utilization at small C_in is acceptable).
    def conv_row(x_refs, w_ref, b):
        acc = jnp.zeros((W_out, Cp), jnp.float32)
        for i in range(kh):
            xi = x_refs[i]
            for j in range(kw):
                col0 = (j % s) * Wq + j // s
                lhs = xi[b, col0:col0 + W_out, :]                             # (W_out, C_in)
                rhs = w_ref[(i * kw + j) * C_in:(i * kw + j + 1) * C_in, :]   # (C_in, Cp)
                acc = acc + jnp.dot(lhs, rhs, preferred_element_type=jnp.float32)
        return acc

    x_specs = [
        pl.BlockSpec((TB, None, s * Wq, C_in), _make_x_index_map(i, s))
        for i in range(kh)
    ]
    w_spec = pl.BlockSpec((KK, Cp), lambda nb, ho: (0, 0))
    row_spec = pl.BlockSpec((1, Cp), lambda nb, ho: (0, 0))

    # ---- Pass 1: per-channel sum / sum-of-squares (resident (1, Cp) accumulators).
    def stats_kernel(*refs):
        x_refs = refs[:kh]
        w_ref = refs[kh]
        sum_ref, sumsq_ref = refs[kh + 1], refs[kh + 2]

        @pl.when((pl.program_id(0) == 0) & (pl.program_id(1) == 0))
        def _():
            sum_ref[...] = jnp.zeros_like(sum_ref)
            sumsq_ref[...] = jnp.zeros_like(sumsq_ref)

        s_acc = jnp.zeros((1, Cp), jnp.float32)
        q_acc = jnp.zeros((1, Cp), jnp.float32)
        for b in range(TB):
            y = conv_row(x_refs, w_ref, b)
            s_acc = s_acc + jnp.sum(y, axis=0, keepdims=True)
            q_acc = q_acc + jnp.sum(y * y, axis=0, keepdims=True)
        sum_ref[...] += s_acc
        sumsq_ref[...] += q_acc

    ysum, ysumsq = pl.pallas_call(
        stats_kernel,
        grid=grid,
        in_specs=x_specs + [w_spec],
        out_specs=(row_spec, row_spec),
        out_shape=(jax.ShapeDtypeStruct((1, Cp), jnp.float32),
                   jax.ShapeDtypeStruct((1, Cp), jnp.float32)),
        compiler_params=pltpu.CompilerParams(
            # shared resident accumulator -> sequential grid.
            # TODO(synk): per-core partial stats to use both v7x TensorCores here.
            dimension_semantics=("arbitrary", "arbitrary"),
            vmem_limit_bytes=VMEM_LIMIT),
    )(*([xq] * kh), w_flat)

    # ---- BN scale/shift computed ONCE from the sums (tiny (1, Cp) op).
    # NOTE: var = E[y^2] - mean^2 can lose precision when |mean| >> std; a shifted second
    # moment would be the robust fix, acceptable here for the forward pass.
    mean = ysum / P
    var = jnp.maximum(ysumsq / P - mean * mean, 0.0)
    g_row = jnp.pad(gamma.astype(jnp.float32).reshape(1, C_out), ((0, 0), (0, Cp - C_out)))
    b_row = jnp.pad(beta.astype(jnp.float32).reshape(1, C_out), ((0, 0), (0, Cp - C_out)))
    scale = g_row * lax.rsqrt(var + BN_EPS)
    shift = b_row - mean * scale

    # ---- Pass 2: recompute the conv (no (P, Cp) intermediate in HBM), apply the affine
    # BN + SiLU, write lane-dense NHWC rows. Fully parallel (no accumulator).
    def bn_silu_kernel(*refs):
        x_refs = refs[:kh]
        w_ref = refs[kh]
        scale_ref, shift_ref = refs[kh + 1], refs[kh + 2]
        out_ref = refs[kh + 3]
        sc = scale_ref[...]
        sh = shift_ref[...]
        for b in range(TB):
            y = conv_row(x_refs, w_ref, b)
            y_bn = y * sc + sh
            out_ref[b] = (y_bn * jax.nn.sigmoid(y_bn)).astype(out_ref.dtype)

    out_padded = pl.pallas_call(
        bn_silu_kernel,
        grid=grid,
        in_specs=x_specs + [w_spec, row_spec, row_spec],
        out_specs=pl.BlockSpec((TB, None, W_out, Cp), lambda nb, ho: (nb, ho, 0, 0)),
        out_shape=jax.ShapeDtypeStruct((N, H_out, W_out, Cp), out_dtype),
        compiler_params=pltpu.CompilerParams(
            dimension_semantics=("parallel", "parallel"),
            vmem_limit_bytes=VMEM_LIMIT),
    )(*([xq] * kh), w_flat, scale, shift)

    out_nhwc = out_padded[..., :C_out]
    if channels_last_out:
        return out_nhwc  # avoid the NHWC->NCHW HBM round trip when the consumer allows it
    return jnp.transpose(out_nhwc, (0, 3, 1, 2))


def reference_forward(x, weight, bias, gamma, beta, *, stride, padding):
    """Pure-JAX f32 reference mirroring PyTorch Conv2d(bias) -> BatchNorm2d(train) -> SiLU."""
    y = lax.conv_general_dilated(
        x, weight,
        window_strides=(stride, stride),
        padding=[(padding, padding), (padding, padding)],
        dimension_numbers=("NCHW", "OIHW", "NCHW"))
    y = y + bias.reshape(1, -1, 1, 1)
    mean = jnp.mean(y, axis=(0, 2, 3), keepdims=True)
    var = jnp.mean((y - mean) ** 2, axis=(0, 2, 3), keepdims=True)
    y_bn = (y - mean) * lax.rsqrt(var + BN_EPS) * gamma.reshape(1, -1, 1, 1) + beta.reshape(1, -1, 1, 1)
    return y_bn * jax.nn.sigmoid(y_bn)


if __name__ == "__main__":
    key = jax.random.PRNGKey(0)
    k1, k2, k3, k4, k5 = jax.random.split(key, 5)

    # Case 1: ConvBlock(4, 8, kernel_size=3, stride=1, padding=1) on (2, 4, 16, 16).
    N, C_in, H, W = 2, 4, 16, 16
    C_out, kh, kw = 8, 3, 3
    stride, padding = 1, 1
    x = jax.random.normal(k1, (N, C_in, H, W), dtype=jnp.float32)
    weight = jax.random.normal(k2, (C_out, C_in, kh, kw), dtype=jnp.float32) * 0.1
    bias = jax.random.normal(k3, (C_out,), dtype=jnp.float32) * 0.1
    gamma = jnp.ones((C_out,), dtype=jnp.float32)   # fresh BatchNorm2d: weight = 1
    beta = jnp.zeros((C_out,), dtype=jnp.float32)   # fresh BatchNorm2d: bias = 0

    ref = reference_forward(x, weight, bias, gamma, beta, stride=stride, padding=padding)
    ref_nhwc = jnp.transpose(ref, (0, 2, 3, 1))

    # f32 MXU path (tight tolerance), NHWC output (default, no transpose round trip).
    out_f32 = conv_block_forward(x, weight, bias, gamma, beta, stride=stride,
                                 padding=padding, compute_dtype=jnp.float32)
    out_f32 = jax.block_until_ready(out_f32)
    assert out_f32.shape == (N, H, W, C_out), out_f32.shape
    assert jnp.allclose(out_f32, ref_nhwc, atol=1e-4, rtol=1e-4), \
        float(jnp.max(jnp.abs(out_f32 - ref_nhwc)))

    # bf16 MXU path (default / fast), NCHW output requested for layout parity check.
    out_bf16 = conv_block_forward(x, weight, bias, gamma, beta, stride=stride,
                                  padding=padding, compute_dtype=jnp.bfloat16,
                                  channels_last_out=False)
    out_bf16 = jax.block_until_ready(out_bf16)
    assert out_bf16.shape == ref.shape, (out_bf16.shape, ref.shape)
    assert jnp.allclose(out_bf16, ref, atol=5e-2, rtol=5e-2), \
        float(jnp.max(jnp.abs(out_bf16 - ref)))

    # Case 2: strided conv, odd spatial size, C_in=3 (exercises the W phase-split path).
    N2, C_in2, H2, W2, C_out2 = 2, 3, 15, 15, 16
    stride2, padding2 = 2, 1
    x2 = jax.random.normal(k4, (N2, C_in2, H2, W2), dtype=jnp.float32)
    w2 = jax.random.normal(k5, (C_out2, C_in2, 3, 3), dtype=jnp.float32) * 0.1
    b2 = jnp.zeros((C_out2,), dtype=jnp.float32)
    g2 = jnp.ones((C_out2,), dtype=jnp.float32)
    be2 = jnp.zeros((C_out2,), dtype=jnp.float32)
    ref2 = reference_forward(x2, w2, b2, g2, be2, stride=stride2, padding=padding2)
    out2 = conv_block_forward(x2, w2, b2, g2, be2, stride=stride2, padding=padding2,
                              compute_dtype=jnp.float32, channels_last_out=False)
    out2 = jax.block_until_ready(out2)
    assert out2.shape == ref2.shape, (out2.shape, ref2.shape)
    assert jnp.allclose(out2, ref2, atol=1e-4, rtol=1e-4), \
        float(jnp.max(jnp.abs(out2 - ref2)))

    print("KERNEL_OK")
</pallas_src>

<mosaic_0001>
module attributes {stable_mosaic.version = 11 : i64} {
  func.func @stats_kernel(%arg0: i32, %arg1: i32, %arg2: memref<2x1x18x4xf32, #tpu.memory_space<vmem>>, %arg3: memref<2x1x18x4xf32, #tpu.memory_space<vmem>>, %arg4: memref<2x1x18x4xf32, #tpu.memory_space<vmem>>, %arg5: memref<36x128xf32, #tpu.memory_space<vmem>>, %arg6: memref<1x128xf32, #tpu.memory_space<vmem>>, %arg7: memref<1x128xf32, #tpu.memory_space<vmem>>) attributes {dimension_semantics = [#tpu.dimension_semantics<arbitrary>, #tpu.dimension_semantics<arbitrary>], iteration_bounds = array<i64: 1, 16>, scalar_prefetch = 0 : i64, scratch_operands = 0 : i64, tpu.core_type = #tpu.core_type<tc>, window_params = [{transform_indices = @transform_0, window_bounds = array<i64: 2, 1, 18, 4>}, {transform_indices = @transform_1, window_bounds = array<i64: 2, 1, 18, 4>}, {transform_indices = @transform_2, window_bounds = array<i64: 2, 1, 18, 4>}, {pipeline_mode = #tpu.pipeline_mode<synchronous>, transform_indices = @transform_3, window_bounds = array<i64: 36, 128>}, {pipeline_mode = #tpu.pipeline_mode<synchronous>, transform_indices = @transform_4, window_bounds = array<i64: 1, 128>}, {pipeline_mode = #tpu.pipeline_mode<synchronous>, transform_indices = @transform_5, window_bounds = array<i64: 1, 128>}]} {
    %c0_i32 = arith.constant 0 : i32
    %0 = arith.cmpi eq, %arg0, %c0_i32 : i32
    %c0_i32_0 = arith.constant 0 : i32
    %1 = arith.cmpi eq, %arg1, %c0_i32_0 : i32
    %2 = arith.andi %0, %1 : i1
    %3 = arith.extui %2 : i1 to i32
    %c0_i32_1 = arith.constant 0 : i32
    %4 = arith.cmpi ne, %3, %c0_i32_1 : i32
    scf.if %4 {
      %cst_132 = arith.constant 0.000000e+00 : f32
      %119 = vector.broadcast %cst_132 : f32 to vector<1x128xf32>
      %c0_133 = arith.constant 0 : index
      %c0_134 = arith.constant 0 : index
      %120 = vector.load %arg6[%c0_133, %c0_134] : memref<1x128xf32, #tpu.memory_space<vmem>>, vector<1x128xf32>
      tpu.vector_store %arg6[%c0_133, %c0_134], %119 {strides = array<i32>} : memref<1x128xf32, #tpu.memory_space<vmem>>, vector<1x128xf32>,
      %cst_135 = arith.constant 0.000000e+00 : f32
      %121 = vector.broadcast %cst_135 : f32 to vector<1x128xf32>
      %c0_136 = arith.constant 0 : index
      %c0_137 = arith.constant 0 : index
      %122 = vector.load %arg7[%c0_136, %c0_137] : memref<1x128xf32, #tpu.memory_space<vmem>>, vector<1x128xf32>
      tpu.vector_store %arg7[%c0_136, %c0_137], %121 {strides = array<i32>} : memref<1x128xf32, #tpu.memory_space<vmem>>, vector<1x128xf32>,
    } else {
    }
    %cst = arith.constant 0.000000e+00 : f32
    %5 = vector.broadcast %cst : f32 to vector<1x128xf32>
    %cst_2 = arith.constant 0.000000e+00 : f32
    %6 = vector.broadcast %cst_2 : f32 to vector<1x128xf32>
    %cst_3 = arith.constant 0.000000e+00 : f32
    %7 = vector.broadcast %cst_3 : f32 to vector<16x128xf32>
    %c0 = arith.constant 0 : index
    %c0_4 = arith.constant 0 : index
    %c0_5 = arith.constant 0 : index
    %c0_6 = arith.constant 0 : index
    %8 = vector.load %arg2[%c0, %c0_4, %c0_5, %c0_6] : memref<2x1x18x4xf32, #tpu.memory_space<vmem>>, vector<1x1x16x4xf32>
    %9 = vector.shape_cast %8 : vector<1x1x16x4xf32> to vector<16x4xf32>
    %c0_7 = arith.constant 0 : index
    %c0_8 = arith.constant 0 : index
    %10 = vector.load %arg5[%c0_7, %c0_8] : memref<36x128xf32, #tpu.memory_space<vmem>>, vector<4x128xf32>
    %cst_9 = arith.constant dense<0.000000e+00> : vector<16x128xf32>
    %11 = tpu.matmul %9, %10, %cst_9 {dimension_numbers = #tpu.dot_dimension_numbers<[1], [0], [0], [1], [0, 0, 1, 1], [], []>} : vector<16x4xf32>, vector<4x128xf32>, vector<16x128xf32> -> vector<16x128xf32>
    %12 = arith.addf %7, %11 : vector<16x128xf32>
    %c0_10 = arith.constant 0 : index
    %c0_11 = arith.constant 0 : index
    %c1 = arith.constant 1 : index
    %c0_12 = arith.constant 0 : index
    %13 = vector.load %arg2[%c0_10, %c0_11, %c1, %c0_12] : memref<2x1x18x4xf32, #tpu.memory_space<vmem>>, vector<1x1x16x4xf32>
    %14 = vector.shape_cast %13 : vector<1x1x16x4xf32> to vector<16x4xf32>
    %c4 = arith.constant 4 : index
    %c0_13 = arith.constant 0 : index
    %15 = vector.load %arg5[%c4, %c0_13] : memref<36x128xf32, #tpu.memory_space<vmem>>, vector<4x128xf32>
    %cst_14 = arith.constant dense<0.000000e+00> : vector<16x128xf32>
    %16 = tpu.matmul %14, %15, %cst_14 {dimension_numbers = #tpu.dot_dimension_numbers<[1], [0], [0], [1], [0, 0, 1, 1], [], []>} : vector<16x4xf32>, vector<4x128xf32>, vector<16x128xf32> -> vector<16x128xf32>
    %17 = arith.addf %12, %16 : vector<16x128xf32>
    %c0_15 = arith.constant 0 : index
    %c0_16 = arith.constant 0 : index
    %c2 = arith.constant 2 : index
    %c0_17 = arith.constant 0 : index
    %18 = vector.load %arg2[%c0_15, %c0_16, %c2, %c0_17] : memref<2x1x18x4xf32, #tpu.memory_space<vmem>>, vector<1x1x16x4xf32>
    %19 = vector.shape_cast %18 : vector<1x1x16x4xf32> to vector<16x4xf32>
    %c8 = arith.constant 8 : index
    %c0_18 = arith.constant 0 : index
    %20 = vector.load %arg5[%c8, %c0_18] : memref<36x128xf32, #tpu.memory_space<vmem>>, vector<4x128xf32>
    %cst_19 = arith.constant dense<0.000000e+00> : vector<16x128xf32>
    %21 = tpu.matmul %19, %20, %cst_19 {dimension_numbers = #tpu.dot_dimension_numbers<[1], [0], [0], [1], [0, 0, 1, 1], [], []>} : vector<16x4xf32>, vector<4x128xf32>, vector<16x128xf32> -> vector<16x128xf32>
    %22 = arith.addf %17, %21 : vector<16x128xf32>
    %c0_20 = arith.constant 0 : index
    %c0_21 = arith.constant 0 : index
    %c0_22 = arith.constant 0 : index
    %c0_23 = arith.constant 0 : index
    %23 = vector.load %arg3[%c0_20, %c0_21, %c0_22, %c0_23] : memref<2x1x18x4xf32, #tpu.memory_space<vmem>>, vector<1x1x16x4xf32>
    %24 = vector.shape_cast %23 : vector<1x1x16x4xf32> to vector<16x4xf32>
    %c12 = arith.constant 12 : index
    %c0_24 = arith.constant 0 : index
    %25 = vector.load %arg5[%c12, %c0_24] : memref<36x128xf32, #tpu.memory_space<vmem>>, vector<4x128xf32>
    %cst_25 = arith.constant dense<0.000000e+00> : vector<16x128xf32>
    %26 = tpu.matmul %24, %25, %cst_25 {dimension_numbers = #tpu.dot_dimension_numbers<[1], [0], [0], [1], [0, 0, 1, 1], [], []>} : vector<16x4xf32>, vector<4x128xf32>, vector<16x128xf32> -> vector<16x128xf32>
    %27 = arith.addf %22, %26 : vector<16x128xf32>
    %c0_26 = arith.constant 0 : index
    %c0_27 = arith.constant 0 : index
    %c1_28 = arith.constant 1 : index
    %c0_29 = arith.constant 0 : index
    %28 = vector.load %arg3[%c0_26, %c0_27, %c1_28, %c0_29] : memref<2x1x18x4xf32, #tpu.memory_space<vmem>>, vector<1x1x16x4xf32>
    %29 = vector.shape_cast %28 : vector<1x1x16x4xf32> to vector<16x4xf32>
    %c16 = arith.constant 16 : index
    %c0_30 = arith.constant 0 : index
    %30 = vector.load %arg5[%c16, %c0_30] : memref<36x128xf32, #tpu.memory_space<vmem>>, vector<4x128xf32>
    %cst_31 = arith.constant dense<0.000000e+00> : vector<16x128xf32>
    %31 = tpu.matmul %29, %30, %cst_31 {dimension_numbers = #tpu.dot_dimension_numbers<[1], [0], [0], [1], [0, 0, 1, 1], [], []>} : vector<16x4xf32>, vector<4x128xf32>, vector<16x128xf32> -> vector<16x128xf32>
    %32 = arith.addf %27, %31 : vector<16x128xf32>
    %c0_32 = arith.constant 0 : index
    %c0_33 = arith.constant 0 : index
    %c2_34 = arith.constant 2 : index
    %c0_35 = arith.constant 0 : index
    %33 = vector.load %arg3[%c0_32, %c0_33, %c2_34, %c0_35] : memref<2x1x18x4xf32, #tpu.memory_space<vmem>>, vector<1x1x16x4xf32>
    %34 = vector.shape_cast %33 : vector<1x1x16x4xf32> to vector<16x4xf32>
    %c20 = arith.constant 20 : index
    %c0_36 = arith.constant 0 : index
    %35 = vector.load %arg5[%c20, %c0_36] : memref<36x128xf32, #tpu.memory_space<vmem>>, vector<4x128xf32>
    %cst_37 = arith.constant dense<0.000000e+00> : vector<16x128xf32>
    %36 = tpu.matmul %34, %35, %cst_37 {dimension_numbers = #tpu.dot_dimension_numbers<[1], [0], [0], [1], [0, 0, 1, 1], [], []>} : vector<16x4xf32>, vector<4x128xf32>, vector<16x128xf32> -> vector<16x128xf32>
    %37 = arith.addf %32, %36 : vector<16x128xf32>
    %c0_38 = arith.constant 0 : index
    %c0_39 = arith.constant 0 : index
    %c0_40 = arith.constant 0 : index
    %c0_41 = arith.constant 0 : index
    %38 = vector.load %arg4[%c0_38, %c0_39, %c0_40, %c0_41] : memref<2x1x18x4xf32, #tpu.memory_space<vmem>>, vector<1x1x16x4xf32>
    %39 = vector.shape_cast %38 : vector<1x1x16x4xf32> to vector<16x4xf32>
    %c24 = arith.constant 24 : index
    %c0_42 = arith.constant 0 : index
    %40 = vector.load %arg5[%c24, %c0_42] : memref<36x128xf32, #tpu.memory_space<vmem>>, vector<4x128xf32>
    %cst_43 = arith.constant dense<0.000000e+00> : vector<16x128xf32>
    %41 = tpu.matmul %39, %40, %cst_43 {dimension_numbers = #tpu.dot_dimension_numbers<[1], [0], [0], [1], [0, 0, 1, 1], [], []>} : vector<16x4xf32>, vector<4x128xf32>, vector<16x128xf32> -> vector<16x128xf32>
    %42 = arith.addf %37, %41 : vector<16x128xf32>
    %c0_44 = arith.constant 0 : index
    %c0_45 = arith.constant 0 : index
    %c1_46 = arith.constant 1 : index
    %c0_47 = arith.constant 0 : index
    %43 = vector.load %arg4[%c0_44, %c0_45, %c1_46, %c0_47] : memref<2x1x18x4xf32, #tpu.memory_space<vmem>>, vector<1x1x16x4xf32>
    %44 = vector.shape_cast %43 : vector<1x1x16x4xf32> to vector<16x4xf32>
    %c28 = arith.constant 28 : index
    %c0_48 = arith.constant 0 : index
    %45 = vector.load %arg5[%c28, %c0_48] : memref<36x128xf32, #tpu.memory_space<vmem>>, vector<4x128xf32>
    %cst_49 = arith.constant dense<0.000000e+00> : vector<16x128xf32>
    %46 = tpu.matmul %44, %45, %cst_49 {dimension_numbers = #tpu.dot_dimension_numbers<[1], [0], [0], [1], [0, 0, 1, 1], [], []>} : vector<16x4xf32>, vector<4x128xf32>, vector<16x128xf32> -> vector<16x128xf32>
    %47 = arith.addf %42, %46 : vector<16x128xf32>
    %c0_50 = arith.constant 0 : index
    %c0_51 = arith.constant 0 : index
    %c2_52 = arith.constant 2 : index
    %c0_53 = arith.constant 0 : index
    %48 = vector.load %arg4[%c0_50, %c0_51, %c2_52, %c0_53] : memref<2x1x18x4xf32, #tpu.memory_space<vmem>>, vector<1x1x16x4xf32>
    %49 = vector.shape_cast %48 : vector<1x1x16x4xf32> to vector<16x4xf32>
    %c32 = arith.constant 32 : index
    %c0_54 = arith.constant 0 : index
    %50 = vector.load %arg5[%c32, %c0_54] : memref<36x128xf32, #tpu.memory_space<vmem>>, vector<4x128xf32>
    %cst_55 = arith.constant dense<0.000000e+00> : vector<16x128xf32>
    %51 = tpu.matmul %49, %50, %cst_55 {dimension_numbers = #tpu.dot_dimension_numbers<[1], [0], [0], [1], [0, 0, 1, 1], [], []>} : vector<16x4xf32>, vector<4x128xf32>, vector<16x128xf32> -> vector<16x128xf32>
    %52 = arith.addf %47, %51 : vector<16x128xf32>
    %cst_56 = arith.constant dense<0.000000e+00> : vector<128xf32>
    %53 = vector.multi_reduction <add>, %52, %cst_56 [0] : vector<16x128xf32> to vector<128xf32>
    %54 = vector.shape_cast %53 : vector<128xf32> to vector<1x128xf32>
    %55 = arith.addf %5, %54 : vector<1x128xf32>
    %56 = arith.mulf %52, %52 : vector<16x128xf32>
    %cst_57 = arith.constant dense<0.000000e+00> : vector<128xf32>
    %57 = vector.multi_reduction <add>, %56, %cst_57 [0] : vector<16x128xf32> to vector<128xf32>
    %58 = vector.shape_cast %57 : vector<128xf32> to vector<1x128xf32>
    %59 = arith.addf %6, %58 : vector<1x128xf32>
    %cst_58 = arith.constant 0.000000e+00 : f32
    %60 = vector.broadcast %cst_58 : f32 to vector<16x128xf32>
    %c1_59 = arith.constant 1 : index
    %c0_60 = arith.constant 0 : index
    %c0_61 = arith.constant 0 : index
    %c0_62 = arith.constant 0 : index
    %61 = vector.load %arg2[%c1_59, %c0_60, %c0_61, %c0_62] : memref<2x1x18x4xf32, #tpu.memory_space<vmem>>, vector<1x1x16x4xf32>
    %62 = vector.shape_cast %61 : vector<1x1x16x4xf32> to vector<16x4xf32>
    %c0_63 = arith.constant 0 : index
    %c0_64 = arith.constant 0 : index
    %63 = vector.load %arg5[%c0_63, %c0_64] : memref<36x128xf32, #tpu.memory_space<vmem>>, vector<4x128xf32>
    %cst_65 = arith.constant dense<0.000000e+00> : vector<16x128xf32>
    %64 = tpu.matmul %62, %63, %cst_65 {dimension_numbers = #tpu.dot_dimension_numbers<[1], [0], [0], [1], [0, 0, 1, 1], [], []>} : vector<16x4xf32>, vector<4x128xf32>, vector<16x128xf32> -> vector<16x128xf32>
    %65 = arith.addf %60, %64 : vector<16x128xf32>
    %c1_66 = arith.constant 1 : index
    %c0_67 = arith.constant 0 : index
    %c1_68 = arith.constant 1 : index
    %c0_69 = arith.constant 0 : index
    %66 = vector.load %arg2[%c1_66, %c0_67, %c1_68, %c0_69] : memref<2x1x18x4xf32, #tpu.memory_space<vmem>>, vector<1x1x16x4xf32>
    %67 = vector.shape_cast %66 : vector<1x1x16x4xf32> to vector<16x4xf32>
    %c4_70 = arith.constant 4 : index
    %c0_71 = arith.constant 0 : index
    %68 = vector.load %arg5[%c4_70, %c0_71] : memref<36x128xf32, #tpu.memory_space<vmem>>, vector<4x128xf32>
    %cst_72 = arith.constant dense<0.000000e+00> : vector<16x128xf32>
    %69 = tpu.matmul %67, %68, %cst_72 {dimension_numbers = #tpu.dot_dimension_numbers<[1], [0], [0], [1], [0, 0, 1, 1], [], []>} : vector<16x4xf32>, vector<4x128xf32>, vector<16x128xf32> -> vector<16x128xf32>
    %70 = arith.addf %65, %69 : vector<16x128xf32>
    %c1_73 = arith.constant 1 : index
    %c0_74 = arith.constant 0 : index
    %c2_75 = arith.constant 2 : index
    %c0_76 = arith.constant 0 : index
    %71 = vector.load %arg2[%c1_73, %c0_74, %c2_75, %c0_76] : memref<2x1x18x4xf32, #tpu.memory_space<vmem>>, vector<1x1x16x4xf32>
    %72 = vector.shape_cast %71 : vector<1x1x16x4xf32> to vector<16x4xf32>
    %c8_77 = arith.constant 8 : index
    %c0_78 = arith.constant 0 : index
    %73 = vector.load %arg5[%c8_77, %c0_78] : memref<36x128xf32, #tpu.memory_space<vmem>>, vector<4x128xf32>
    %cst_79 = arith.constant dense<0.000000e+00> : vector<16x128xf32>
    %74 = tpu.matmul %72, %73, %cst_79 {dimension_numbers = #tpu.dot_dimension_numbers<[1], [0], [0], [1], [0, 0, 1, 1], [], []>} : vector<16x4xf32>, vector<4x128xf32>, vector<16x128xf32> -> vector<16x128xf32>
    %75 = arith.addf %70, %74 : vector<16x128xf32>
    %c1_80 = arith.constant 1 : index
    %c0_81 = arith.constant 0 : index
    %c0_82 = arith.constant 0 : index
    %c0_83 = arith.constant 0 : index
    %76 = vector.load %arg3[%c1_80, %c0_81, %c0_82, %c0_83] : memref<2x1x18x4xf32, #tpu.memory_space<vmem>>, vector<1x1x16x4xf32>
    %77 = vector.shape_cast %76 : vector<1x1x16x4xf32> to vector<16x4xf32>
    %c12_84 = arith.constant 12 : index
    %c0_85 = arith.constant 0 : index
    %78 = vector.load %arg5[%c12_84, %c0_85] : memref<36x128xf32, #tpu.memory_space<vmem>>, vector<4x128xf32>
    %cst_86 = arith.constant dense<0.000000e+00> : vector<16x128xf32>
    %79 = tpu.matmul %77, %78, %cst_86 {dimension_numbers = #tpu.dot_dimension_numbers<[1], [0], [0], [1], [0, 0, 1, 1], [], []>} : vector<16x4xf32>, vector<4x128xf32>, vector<16x128xf32> -> vector<16x128xf32>
    %80 = arith.addf %75, %79 : vector<16x128xf32>
    %c1_87 = arith.constant 1 : index
    %c0_88 = arith.constant 0 : index
    %c1_89 = arith.constant 1 : index
    %c0_90 = arith.constant 0 : index
    %81 = vector.load %arg3[%c1_87, %c0_88, %c1_89, %c0_90] : memref<2x1x18x4xf32, #tpu.memory_space<vmem>>, vector<1x1x16x4xf32>
    %82 = vector.shape_cast %81 : vector<1x1x16x4xf32> to vector<16x4xf32>
    %c16_91 = arith.constant 16 : index
    %c0_92 = arith.constant 0 : index
    %83 = vector.load %arg5[%c16_91, %c0_92] : memref<36x128xf32, #tpu.memory_space<vmem>>, vector<4x128xf32>
    %cst_93 = arith.constant dense<0.000000e+00> : vector<16x128xf32>
    %84 = tpu.matmul %82, %83, %cst_93 {dimension_numbers = #tpu.dot_dimension_numbers<[1], [0], [0], [1], [0, 0, 1, 1], [], []>} : vector<16x4xf32>, vector<4x128xf32>, vector<16x128xf32> -> vector<16x128xf32>
    %85 = arith.addf %80, %84 : vector<16x128xf32>
    %c1_94 = arith.constant 1 : index
    %c0_95 = arith.constant 0 : index
    %c2_96 = arith.constant 2 : index
    %c0_97 = arith.constant 0 : index
    %86 = vector.load %arg3[%c1_94, %c0_95, %c2_96, %c0_97] : memref<2x1x18x4xf32, #tpu.memory_space<vmem>>, vector<1x1x16x4xf32>
    %87 = vector.shape_cast %86 : vector<1x1x16x4xf32> to vector<16x4xf32>
    %c20_98 = arith.constant 20 : index
    %c0_99 = arith.constant 0 : index
    %88 = vector.load %arg5[%c20_98, %c0_99] : memref<36x128xf32, #tpu.memory_space<vmem>>, vector<4x128xf32>
    %cst_100 = arith.constant dense<0.000000e+00> : vector<16x128xf32>
    %89 = tpu.matmul %87, %88, %cst_100 {dimension_numbers = #tpu.dot_dimension_numbers<[1], [0], [0], [1], [0, 0, 1, 1], [], []>} : vector<16x4xf32>, vector<4x128xf32>, vector<16x128xf32> -> vector<16x128xf32>
    %90 = arith.addf %85, %89 : vector<16x128xf32>
    %c1_101 = arith.constant 1 : index
    %c0_102 = arith.constant 0 : index
    %c0_103 = arith.constant 0 : index
    %c0_104 = arith.constant 0 : index
    %91 = vector.load %arg4[%c1_101, %c0_102, %c0_103, %c0_104] : memref<2x1x18x4xf32, #tpu.memory_space<vmem>>, vector<1x1x16x4xf32>
    %92 = vector.shape_cast %91 : vector<1x1x16x4xf32> to vector<16x4xf32>
    %c24_105 = arith.constant 24 : index
    %c0_106 = arith.constant 0 : index
    %93 = vector.load %arg5[%c24_105, %c0_106] : memref<36x128xf32, #tpu.memory_space<vmem>>, vector<4x128xf32>
    %cst_107 = arith.constant dense<0.000000e+00> : vector<16x128xf32>
    %94 = tpu.matmul %92, %93, %cst_107 {dimension_numbers = #tpu.dot_dimension_numbers<[1], [0], [0], [1], [0, 0, 1, 1], [], []>} : vector<16x4xf32>, vector<4x128xf32>, vector<16x128xf32> -> vector<16x128xf32>
    %95 = arith.addf %90, %94 : vector<16x128xf32>
    %c1_108 = arith.constant 1 : index
    %c0_109 = arith.constant 0 : index
    %c1_110 = arith.constant 1 : index
    %c0_111 = arith.constant 0 : index
    %96 = vector.load %arg4[%c1_108, %c0_109, %c1_110, %c0_111] : memref<2x1x18x4xf32, #tpu.memory_space<vmem>>, vector<1x1x16x4xf32>
    %97 = vector.shape_cast %96 : vector<1x1x16x4xf32> to vector<16x4xf32>
    %c28_112 = arith.constant 28 : index
    %c0_113 = arith.constant 0 : index
    %98 = vector.load %arg5[%c28_112, %c0_113] : memref<36x128xf32, #tpu.memory_space<vmem>>, vector<4x128xf32>
    %cst_114 = arith.constant dense<0.000000e+00> : vector<16x128xf32>
    %99 = tpu.matmul %97, %98, %cst_114 {dimension_numbers = #tpu.dot_dimension_numbers<[1], [0], [0], [1], [0, 0, 1, 1], [], []>} : vector<16x4xf32>, vector<4x128xf32>, vector<16x128xf32> -> vector<16x128xf32>
    %100 = arith.addf %95, %99 : vector<16x128xf32>
    %c1_115 = arith.constant 1 : index
    %c0_116 = arith.constant 0 : index
    %c2_117 = arith.constant 2 : index
    %c0_118 = arith.constant 0 : index
    %101 = vector.load %arg4[%c1_115, %c0_116, %c2_117, %c0_118] : memref<2x1x18x4xf32, #tpu.memory_space<vmem>>, vector<1x1x16x4xf32>
    %102 = vector.shape_cast %101 : vector<1x1x16x4xf32> to vector<16x4xf32>
    %c32_119 = arith.constant 32 : index
    %c0_120 = arith.constant 0 : index
    %103 = vector.load %arg5[%c32_119, %c0_120] : memref<36x128xf32, #tpu.memory_space<vmem>>, vector<4x128xf32>
    %cst_121 = arith.constant dense<0.000000e+00> : vector<16x128xf32>
    %104 = tpu.matmul %102, %103, %cst_121 {dimension_numbers = #tpu.dot_dimension_numbers<[1], [0], [0], [1], [0, 0, 1, 1], [], []>} : vector<16x4xf32>, vector<4x128xf32>, vector<16x128xf32> -> vector<16x128xf32>
    %105 = arith.addf %100, %104 : vector<16x128xf32>
    %cst_122 = arith.constant dense<0.000000e+00> : vector<128xf32>
    %106 = vector.multi_reduction <add>, %105, %cst_122 [0] : vector<16x128xf32> to vector<128xf32>
    %107 = vector.shape_cast %106 : vector<128xf32> to vector<1x128xf32>
    %108 = arith.addf %55, %107 : vector<1x128xf32>
    %109 = arith.mulf %105, %105 : vector<16x128xf32>
    %cst_123 = arith.constant dense<0.000000e+00> : vector<128xf32>
    %110 = vector.multi_reduction <add>, %109, %cst_123 [0] : vector<16x128xf32> to vector<128xf32>
    %111 = vector.shape_cast %110 : vector<128xf32> to vector<1x128xf32>
    %112 = arith.addf %59, %111 : vector<1x128xf32>
    %c0_124 = arith.constant 0 : index
    %c0_125 = arith.constant 0 : index
    %113 = vector.load %arg6[%c0_124, %c0_125] : memref<1x128xf32, #tpu.memory_space<vmem>>, vector<1x128xf32>
    %114 = arith.addf %113, %108 : vector<1x128xf32>
    %c0_126 = arith.constant 0 : index
    %c0_127 = arith.constant 0 : index
    %115 = vector.load %arg6[%c0_126, %c0_127] : memref<1x128xf32, #tpu.memory_space<vmem>>, vector<1x128xf32>
    tpu.vector_store %arg6[%c0_126, %c0_127], %114 {strides = array<i32>} : memref<1x128xf32, #tpu.memory_space<vmem>>, vector<1x128xf32>,
    %c0_128 = arith.constant 0 : index
    %c0_129 = arith.constant 0 : index
    %116 = vector.load %arg7[%c0_128, %c0_129] : memref<1x128xf32, #tpu.memory_space<vmem>>, vector<1x128xf32>
    %117 = arith.addf %116, %112 : vector<1x128xf32>
    %c0_130 = arith.constant 0 : index
    %c0_131 = arith.constant 0 : index
    %118 = vector.load %arg7[%c0_130, %c0_131] : memref<1x128xf32, #tpu.memory_space<vmem>>, vector<1x128xf32>
    tpu.vector_store %arg7[%c0_130, %c0_131], %117 {strides = array<i32>} : memref<1x128xf32, #tpu.memory_space<vmem>>, vector<1x128xf32>,
    return
  }
  func.func @transform_0(%arg0: i32, %arg1: i32) -> (i32, i32, i32, i32) {
    %c1_i32 = arith.constant 1 : i32
    %0 = arith.muli %arg1, %c1_i32 : i32
    %c0_i32 = arith.constant 0 : i32
    %1 = arith.addi %0, %c0_i32 : i32
    %c0_i32_0 = arith.constant 0 : i32
    %c0_i32_1 = arith.constant 0 : i32
    %c0_i32_2 = arith.constant 0 : i32
    return %arg0, %1, %c0_i32_0, %c0_i32_1 : i32, i32, i32, i32
  }
  func.func @transform_1(%arg0: i32, %arg1: i32) -> (i32, i32, i32, i32) {
    %c1_i32 = arith.constant 1 : i32
    %0 = arith.muli %arg1, %c1_i32 : i32
    %c1_i32_0 = arith.constant 1 : i32
    %1 = arith.addi %0, %c1_i32_0 : i32
    %c0_i32 = arith.constant 0 : i32
    %c0_i32_1 = arith.constant 0 : i32
    %c0_i32_2 = arith.constant 0 : i32
    return %arg0, %1, %c0_i32, %c0_i32_1 : i32, i32, i32, i32
  }
  func.func @transform_2(%arg0: i32, %arg1: i32) -> (i32, i32, i32, i32) {
    %c1_i32 = arith.constant 1 : i32
    %0 = arith.muli %arg1, %c1_i32 : i32
    %c2_i32 = arith.constant 2 : i32
    %1 = arith.addi %0, %c2_i32 : i32
    %c0_i32 = arith.constant 0 : i32
    %c0_i32_0 = arith.constant 0 : i32
    %c0_i32_1 = arith.constant 0 : i32
    return %arg0, %1, %c0_i32, %c0_i32_0 : i32, i32, i32, i32
  }
  func.func @transform_3(%arg0: i32, %arg1: i32) -> (i32, i32) {
    %c0_i32 = arith.constant 0 : i32
    %c0_i32_0 = arith.constant 0 : i32
    %c0_i32_1 = arith.constant 0 : i32
    return %c0_i32, %c0_i32_0 : i32, i32
  }
  func.func @transform_4(%arg0: i32, %arg1: i32) -> (i32, i32) {
    %c0_i32 = arith.constant 0 : i32
    %c0_i32_0 = arith.constant 0 : i32
    %c0_i32_1 = arith.constant 0 : i32
    return %c0_i32, %c0_i32_0 : i32, i32
  }
  func.func @transform_5(%arg0: i32, %arg1: i32) -> (i32, i32) {
    %c0_i32 = arith.constant 0 : i32
    %c0_i32_0 = arith.constant 0 : i32
    %c0_i32_1 = arith.constant 0 : i32
    return %c0_i32, %c0_i32_0 : i32, i32
  }
}

</mosaic_0001>

<llo_original>
// kernel: tpu_custom_call.1
$region0: #{tpu_custom_call.1}
  #allocation0 [shape = 'u32[]', space=smem, size = 0x4, offset = 0x4, fixed_abs, tag = 'smem constant byte address 0x4 - core index']
  #allocation1 [shape = 'u32[72,128]{1,0:T(1,128)}', space=vmem, size = 0x9000, scoped, tag = 'internal scratch']
  %s0 = inlined_call_operand.vmem [shape: f32[2,18,18,4], index: 0, kind: input, shape index: {}]
  %s1 = inlined_call_operand.vmem [shape: f32[2,18,18,4], index: 1, kind: input, shape index: {}]
  %s2 = inlined_call_operand.vmem [shape: f32[2,18,18,4], index: 2, kind: input, shape index: {}]
  %s3 = inlined_call_operand.vmem [shape: f32[36,128], index: 3, kind: input, shape index: {}]
  %s4 = inlined_call_operand.hbm [shape: f32[1,128], index: 4, kind: output, shape index: {0}]
  %s5 = inlined_call_operand.hbm [shape: f32[1,128], index: 5, kind: output, shape index: {1}]
  %6 = xla_tuple %s4, %s5
  %s7 = sld [smem:[#allocation0]]
  $region175: #{tpu_custom_call.1} parent=0
    _
  %s9 = ssub.s32 1, %s7
  %s10 = scalar_select 0, %s9, %s7
  $region1: #{tpu_custom_call.1} parent=0
    #allocation2 [shape = 'u8[49152]{0}', space=vmem, size = 0xc000, scoped, tag = 'input window, operand 0']
    #allocation3 [shape = 'u8[49152]{0}', space=vmem, size = 0xc000, scoped, tag = 'input window, operand 1']
    #allocation4 [shape = 'u8[49152]{0}', space=vmem, size = 0xc000, scoped, tag = 'input window, operand 2']
    #allocation5 [shape = 'u8[512]{0}', space=vmem, size = 0x400, scoped, tag = 'output window, operand 0, single buffered']
    #allocation6 [shape = 's32[2]{0}', space=sflag, size = 0x8, scoped, tag = 'scoped memory for tpu_custom_call.1']
    #allocation7 [shape = 'u8[512]{0}', space=vmem, size = 0x400, scoped, tag = 'output window, operand 1, single buffered']
    #allocation8 [shape = 's32[1]{0}', space=sflag, size = 0x4, scoped, tag = 'scoped memory for tpu_custom_call.1']
    %11 = vsyncpa [#allocation6], 0
    %12 = vsyncpa [#allocation8], 0
    loop: start=0, step=1, limit=18
    $region2: #{tpu_custom_call.1} parent=1 // loop_pre_header
      _
    $region3: #{tpu_custom_call.1} parent=1 // loop_header
      %s14 = sphi 0, %s18
      %p15 = scmp.ge.s32.totalorder %s14, 18
      %s21 = sphi 0, %s33
      %s22 = sphi 0, %s29
      %s23 = sphi 0, %s21
      %s24 = sphi 0, %s22
      %s25 = sphi 0, %s23
      %s26 = sphi 0, %s24
      %s38 = sphi 0, %s40
      %s41 = sphi 0, %s38
      %s42 = sphi 0, %s41
      %s58 = sphi 0, %s42
      %s68 = sphi 0, %s70
      %s71 = sphi 0, %s68
      %s72 = sphi 0, %s71
      %s88 = sphi 0, %s72
      %s98 = sphi 0, %s100
      %s101 = sphi 0, %s98
      %s102 = sphi 0, %s101
      %s118 = sphi 0, %s102
      %s122 = sphi 0, %s122
      %s124 = sphi 0, %s122
      %s125 = sphi 0, %s124
      %s139 = sphi 0, %s125
      %s143 = sphi 0, %s143
      %s145 = sphi 0, %s143
      %s146 = sphi 0, %s145
      %s160 = sphi 0, %s146
      %s164 = sphi 0, %s164
      %s166 = sphi 0, %s164
      %s167 = sphi 0, %s166
      %s181 = sphi 0, %s167
    $region4: #{tpu_custom_call.1} parent=1 // loop_header_branch
      %17 = sbr.rel (%p15) target = $region8
    $region5: #{tpu_custom_call.1} parent=1 // loop_body
      %s19 = ssub.s32 %s14, 1
      %s20 = ssub.s32 %s14, 2
      %s27 = sadd.s32 1, %s22
      %p28 = scmp.ge.s32.totalorder %s27, 16
      %s29 = scalar_select %p28, 0, %s27
      %s30 = sadd.s32 1, %s21
      %s31 = scalar_select %p28, %s30, %s21
      %p32 = scmp.ge.s32.totalorder %s31, 1
      %s33 = scalar_select %p32, 0, %s31
      %s34 = ssub.s32 %s21, %s33
      %s35 = ssub.s32 %s22, %s29
      %s36 = sor.u32 %s34, %s35
      %p37 = scmp.eq.s32.totalorder %s36, 0
      %s39 = sadd.s32 %s38, 1
      %s40 = scalar_select %p37, %s38, %s39
      %p43 = pneg %p37
      %p44 = scmp.eq.s32.totalorder %s14, 15
      %p45 = por %p43, %p44
      %p46 = scmp.ne.s32.totalorder %s38, %s41
      %p47 = scmp.eq.s32.totalorder %s14, 0
      %p48 = por %p46, %p47
      %p49 = scmp.ne.s32.totalorder %s38, %s41
      %p50 = scmp.eq.s32.totalorder %s19, 15
      %p51 = por %p49, %p50
      %p52 = scmp.ne.s32.totalorder %s41, %s42
      %p53 = scmp.eq.s32.totalorder %s19, 0
      %p54 = por %p52, %p53
      %p55 = scmp.ne.s32.totalorder %s41, %s42
      %p56 = scmp.eq.s32.totalorder %s20, 15
      %p57 = por %p55, %p56
      %p59 = scmp.ne.s32.totalorder %s42, %s58
      %p60 = scmp.eq.s32.totalorder %s20, 0
      %p61 = por %p59, %p60
      %s62 = sadd.s32 %s22, 1
      %s63 = sadd.s32 %s29, 1
      %s64 = ssub.s32 %s21, %s33
      %s65 = ssub.s32 %s62, %s63
      %s66 = sor.u32 %s64, %s65
      %p67 = scmp.eq.s32.totalorder %s66, 0
      %s69 = sadd.s32 %s68, 1
      %s70 = scalar_select %p67, %s68, %s69
      %p73 = pneg %p67
      %p74 = scmp.eq.s32.totalorder %s14, 15
      %p75 = por %p73, %p74
      %p76 = scmp.ne.s32.totalorder %s68, %s71
      %p77 = scmp.eq.s32.totalorder %s14, 0
      %p78 = por %p76, %p77
      %p79 = scmp.ne.s32.totalorder %s68, %s71
      %p80 = scmp.eq.s32.totalorder %s19, 15
      %p81 = por %p79, %p80
      %p82 = scmp.ne.s32.totalorder %s71, %s72
      %p83 = scmp.eq.s32.totalorder %s19, 0
      %p84 = por %p82, %p83
      %p85 = scmp.ne.s32.totalorder %s71, %s72
      %p86 = scmp.eq.s32.totalorder %s20, 15
      %p87 = por %p85, %p86
      %p89 = scmp.ne.s32.totalorder %s72, %s88
      %p90 = scmp.eq.s32.totalorder %s20, 0
      %p91 = por %p89, %p90
      %s92 = sadd.s32 %s22, 2
      %s93 = sadd.s32 %s29, 2
      %s94 = ssub.s32 %s21, %s33
      %s95 = ssub.s32 %s92, %s93
      %s96 = sor.u32 %s94, %s95
      %p97 = scmp.eq.s32.totalorder %s96, 0
      %s99 = sadd.s32 %s98, 1
      %s100 = scalar_select %p97, %s98, %s99
      %p103 = pneg %p97
      %p104 = scmp.eq.s32.totalorder %s14, 15
      %p105 = por %p103, %p104
      %p106 = scmp.ne.s32.totalorder %s98, %s101
      %p107 = scmp.eq.s32.totalorder %s14, 0
      %p108 = por %p106, %p107
      %p109 = scmp.ne.s32.totalorder %s98, %s101
      %p110 = scmp.eq.s32.totalorder %s19, 15
      %p111 = por %p109, %p110
      %p112 = scmp.ne.s32.totalorder %s101, %s102
      %p113 = scmp.eq.s32.totalorder %s19, 0
      %p114 = por %p112, %p113
      %p115 = scmp.ne.s32.totalorder %s101, %s102
      %p116 = scmp.eq.s32.totalorder %s20, 15
      %p117 = por %p115, %p116
      %p119 = scmp.ne.s32.totalorder %s102, %s118
      %p120 = scmp.eq.s32.totalorder %s20, 0
      %p121 = por %p119, %p120
      %s123 = sadd.s32 %s122, 1
      %p126 = scmp.eq.s32.totalorder %s14, 15
      %p127 = scmp.ne.s32.totalorder %s122, %s124
      %p128 = scmp.eq.s32.totalorder %s14, 0
      %p129 = por %p127, %p128
      %p130 = scmp.ne.s32.totalorder %s122, %s124
      %p131 = scmp.eq.s32.totalorder %s19, 15
      %p132 = por %p130, %p131
      %p133 = scmp.ne.s32.totalorder %s124, %s125
      %p134 = scmp.eq.s32.totalorder %s19, 0
      %p135 = por %p133, %p134
      %p136 = scmp.ne.s32.totalorder %s124, %s125
      %p137 = scmp.eq.s32.totalorder %s20, 15
      %p138 = por %p136, %p137
      %p140 = scmp.ne.s32.totalorder %s125, %s139
      %p141 = scmp.eq.s32.totalorder %s20, 0
      %p142 = por %p140, %p141
      %s144 = sadd.s32 %s143, 1
      %p147 = scmp.eq.s32.totalorder %s14, 15
      %p148 = scmp.ne.s32.totalorder %s143, %s145
      %p149 = scmp.eq.s32.totalorder %s14, 0
      %p150 = por %p148, %p149
      %p151 = scmp.ne.s32.totalorder %s143, %s145
      %p152 = scmp.eq.s32.totalorder %s19, 15
      %p153 = por %p151, %p152
      %p154 = scmp.ne.s32.totalorder %s145, %s146
      %p155 = scmp.eq.s32.totalorder %s19, 0
      %p156 = por %p154, %p155
      %p157 = scmp.ne.s32.totalorder %s145, %s146
      %p158 = scmp.eq.s32.totalorder %s20, 15
      %p159 = por %p157, %p158
      %p161 = scmp.ne.s32.totalorder %s146, %s160
      %p162 = scmp.eq.s32.totalorder %s20, 0
      %p163 = por %p161, %p162
      %s165 = sadd.s32 %s164, 1
      %p168 = scmp.eq.s32.totalorder %s14, 15
      %p169 = scmp.ne.s32.totalorder %s164, %s166
      %p170 = scmp.eq.s32.totalorder %s14, 0
      %p171 = por %p169, %p170
      %p172 = scmp.ne.s32.totalorder %s164, %s166
      %p173 = scmp.eq.s32.totalorder %s19, 15
      %p174 = por %p172, %p173
      %p175 = scmp.ne.s32.totalorder %s166, %s167
      %p176 = scmp.eq.s32.totalorder %s19, 0
      %p177 = por %p175, %p176
      %p178 = scmp.ne.s32.totalorder %s166, %s167
      %p179 = scmp.eq.s32.totalorder %s20, 15
      %p180 = por %p178, %p179
      %p182 = scmp.ne.s32.totalorder %s167, %s181
      %p183 = scmp.eq.s32.totalorder %s20, 0
      %p184 = por %p182, %p183
      %p185 = scmp.le.s32.totalorder 1, %s14
      %p186 = scmp.lt.s32.totalorder %s14, 17
      %p187 = pnand %p185, %p186
      %p188 = pneg %p187
      // Predicated region
      $region9: #{tpu_custom_call.1} parent=5 // pred_check
        _
      $region10: #{tpu_custom_call.1} parent=5 // pred_check_branch
        %190 = sbr.rel (%p187) target = $region12
      $region11: #{tpu_custom_call.1} parent=5 // pred_region
        %s191 = ssub.s32 %s14, 1
        // Predicated region
        $region13: #{tpu_custom_call.1} parent=11 // pred_check
          %p192 = pneg %p135
        $region14: #{tpu_custom_call.1} parent=11 // pred_check_branch
          %194 = sbr.rel (%p192) target = $region16
        $region15: #{tpu_custom_call.1} parent=11 // pred_region
          _
        $region16: #{tpu_custom_call.1} parent=11 // pred_fallthru
          _
      $region12: #{tpu_custom_call.1} parent=5 // pred_fallthru
        _
      %p195 = scmp.lt.s32.totalorder %s14, 16
      // Predicated region
      $region17: #{tpu_custom_call.1} parent=5 // pred_check
        %p196 = pneg %p195
      $region18: #{tpu_custom_call.1} parent=5 // pred_check_branch
        %198 = sbr.rel (%p196) target = $region20
      $region19: #{tpu_custom_call.1} parent=5 // pred_region
        // Predicated region
        $region21: #{tpu_custom_call.1} parent=19 // pred_check
          %p199 = pneg %p48
        $region22: #{tpu_custom_call.1} parent=19 // pred_check_branch
          %201 = sbr.rel (%p199) target = $region24
        $region23: #{tpu_custom_call.1} parent=19 // pred_region
          %s202 = sand.u32 %s38, 1
          %s203 = sand.u32 %s38, 1
          %s204 = smul.addr %s203, 48
          %s205 = scalar_lea.vmem [#allocation2], %s204
          %s206 = smul.u32 2, %s21
          %s207 = smul.addr %s22, 3
          %s208 = smul.addr %s206, 54
          %s209 = sadd.s32 %s207, %s208
          %s210 = smul.addr %s209, 8
          %s211 = scalar_lea.vmem %s0, %s210
          // Predicated region
          $region25: #{tpu_custom_call.1} parent=23 // pred_check
            _
          $region26: #{tpu_custom_call.1} parent=23 // pred_check_branch
            %213 = sbr.rel (0) target = $region28
          $region27: #{tpu_custom_call.1} parent=23 // pred_region
            // Predicated region
            $region29: #{tpu_custom_call.1} parent=27 // pred_check
              _
            $region30: #{tpu_custom_call.1} parent=27 // pred_check_branch
              %215 = sbr.rel (0) target = $region32
            $region31: #{tpu_custom_call.1} parent=27 // pred_region
              // Predicated region
              $region44: #{tpu_custom_call.1} parent=31 // pred_check
                _
              $region45: #{tpu_custom_call.1} parent=31 // pred_check_branch
                %241 = sbr.rel (0) target = $region47
              $region46: #{tpu_custom_call.1} parent=31 // pred_region
                loop: start=0, step=1, limit=1
                $region48: #{tpu_custom_call.1} parent=46 // loop_pre_header
                  _
                $region49: #{tpu_custom_call.1} parent=46 // loop_header
                  %s243 = sphi 0, %s247
                  %p244 = scmp.ge.s32.totalorder %s243, 1
                  %s248 = sphi %s211, %s211
                  %s249 = sphi %s205, %s205
                $region50: #{tpu_custom_call.1} parent=46 // loop_header_branch
                  %246 = sbr.rel (%p244) target = $region54
                $region51: #{tpu_custom_call.1} parent=46 // loop_body
                  %v250 = vld [vmem:[%s248] sm:$0xff]
                  %251 = vst [vmem:[%s249] sm:$0xff] %v250
                  %v252 = vld [vmem:[%s248 + $0x8] sm:$0xff]
                  %253 = vst [vmem:[%s249 + $0x8] sm:$0xff] %v252
                  %v254 = vld [vmem:[%s248 + $0x10] sm:$0xff]
                  %255 = vst [vmem:[%s249 + $0x10] sm:$0xff] %v254
                  %v256 = vld [vmem:[%s248 + $0x1b0] sm:$0xff]
                  %257 = vst [vmem:[%s249 + $0x18] sm:$0xff] %v256
                  %v258 = vld [vmem:[%s248 + $0x1b8] sm:$0xff]
                  %259 = vst [vmem:[%s249 + $0x20] sm:$0xff] %v258
                  %v260 = vld [vmem:[%s248 + $0x1c0] sm:$0xff]
                  %261 = vst [vmem:[%s249 + $0x28] sm:$0xff] %v260
                $region52: #{tpu_custom_call.1} parent=46 // loop_footer
                  %s247 = sadd.s32 1, %s243
                $region53: #{tpu_custom_call.1} parent=46 // loop_footer_branch
                  %242 = sbr.rel target = $region49
                $region54: #{tpu_custom_call.1} parent=46 // loop_exit
                  _
              $region47: #{tpu_custom_call.1} parent=31 // pred_fallthru
                _
              // Predicated region
              $region55: #{tpu_custom_call.1} parent=31 // pred_check
                _
              $region56: #{tpu_custom_call.1} parent=31 // pred_check_branch
                %263 = sbr.rel target = $region58
              $region57: #{tpu_custom_call.1} parent=31 // pred_region
                _
              $region58: #{tpu_custom_call.1} parent=31 // pred_fallthru
                _
            $region32: #{tpu_custom_call.1} parent=27 // pred_fallthru
              _
            // Predicated region
            $region33: #{tpu_custom_call.1} parent=27 // pred_check
              _
            $region34: #{tpu_custom_call.1} parent=27 // pred_check_branch
              %217 = sbr.rel target = $region36
            $region35: #{tpu_custom_call.1} parent=27 // pred_region
              %s219 = ssub.s32 256, 1
              loop: start=0, step=1, limit=1
              $region37: #{tpu_custom_call.1} parent=35 // loop_pre_header
                _
              $region38: #{tpu_custom_call.1} parent=35 // loop_header
                %s221 = sphi 0, %s225
                %p222 = scmp.ge.s32.totalorder %s221, 1
                %s226 = sphi %s211, %s211
                %s227 = sphi %s205, %s205
              $region39: #{tpu_custom_call.1} parent=35 // loop_header_branch
                %224 = sbr.rel (%p222) target = $region43
              $region40: #{tpu_custom_call.1} parent=35 // loop_body
                %v228 = vld [vmem:[%s226] sm:%s219]
                %229 = vst [vmem:[%s227] sm:%s219] %v228
                %v230 = vld [vmem:[%s226 + $0x8] sm:%s219]
                %231 = vst [vmem:[%s227 + $0x8] sm:%s219] %v230
                %v232 = vld [vmem:[%s226 + $0x10] sm:%s219]
                %233 = vst [vmem:[%s227 + $0x10] sm:%s219] %v232
                %v234 = vld [vmem:[%s226 + $0x1b0] sm:%s219]
                %235 = vst [vmem:[%s227 + $0x18] sm:%s219] %v234
                %v236 = vld [vmem:[%s226 + $0x1b8] sm:%s219]
                %237 = vst [vmem:[%s227 + $0x20] sm:%s219] %v236
                %v238 = vld [vmem:[%s226 + $0x1c0] sm:%s219]
                %239 = vst [vmem:[%s227 + $0x28] sm:%s219] %v238
              $region41: #{tpu_custom_call.1} parent=35 // loop_footer
                %s225 = sadd.s32 1, %s221
              $region42: #{tpu_custom_call.1} parent=35 // loop_footer_branch
                %220 = sbr.rel target = $region38
              $region43: #{tpu_custom_call.1} parent=35 // loop_exit
                _
            $region36: #{tpu_custom_call.1} parent=27 // pred_fallthru
              _
          $region28: #{tpu_custom_call.1} parent=23 // pred_fallthru
            _
          %264 = vnop
        $region24: #{tpu_custom_call.1} parent=19 // pred_fallthru
          _
        // Predicated region
        $region59: #{tpu_custom_call.1} parent=19 // pred_check
          %p265 = pneg %p78
        $region60: #{tpu_custom_call.1} parent=19 // pred_check_branch
          %267 = sbr.rel (%p265) target = $region62
        $region61: #{tpu_custom_call.1} parent=19 // pred_region
          %s268 = sand.u32 %s68, 1
          %s269 = sand.u32 %s68, 1
          %s270 = smul.addr %s269, 48
          %s271 = scalar_lea.vmem [#allocation3], %s270
          %s272 = sadd.s32 %s22, 1
          %s273 = smul.u32 2, %s21
          %s274 = smul.addr %s272, 3
          %s275 = smul.addr %s273, 54
          %s276 = sadd.s32 %s274, %s275
          %s277 = smul.addr %s276, 8
          %s278 = scalar_lea.vmem %s1, %s277
          // Predicated region
          $region63: #{tpu_custom_call.1} parent=61 // pred_check
            _
          $region64: #{tpu_custom_call.1} parent=61 // pred_check_branch
            %280 = sbr.rel (0) target = $region66
          $region65: #{tpu_custom_call.1} parent=61 // pred_region
            // Predicated region
            $region67: #{tpu_custom_call.1} parent=65 // pred_check
              _
            $region68: #{tpu_custom_call.1} parent=65 // pred_check_branch
              %282 = sbr.rel (0) target = $region70
            $region69: #{tpu_custom_call.1} parent=65 // pred_region
              // Predicated region
              $region82: #{tpu_custom_call.1} parent=69 // pred_check
                _
              $region83: #{tpu_custom_call.1} parent=69 // pred_check_branch
                %308 = sbr.rel (0) target = $region85
              $region84: #{tpu_custom_call.1} parent=69 // pred_region
                loop: start=0, step=1, limit=1
                $region86: #{tpu_custom_call.1} parent=84 // loop_pre_header
                  _
                $region87: #{tpu_custom_call.1} parent=84 // loop_header
                  %s310 = sphi 0, %s314
                  %p311 = scmp.ge.s32.totalorder %s310, 1
                  %s315 = sphi %s278, %s278
                  %s316 = sphi %s271, %s271
                $region88: #{tpu_custom_call.1} parent=84 // loop_header_branch
                  %313 = sbr.rel (%p311) target = $region92
                $region89: #{tpu_custom_call.1} parent=84 // loop_body
                  %v317 = vld [vmem:[%s315] sm:$0xff]
                  %318 = vst [vmem:[%s316] sm:$0xff] %v317
                  %v319 = vld [vmem:[%s315 + $0x8] sm:$0xff]
                  %320 = vst [vmem:[%s316 + $0x8] sm:$0xff] %v319
                  %v321 = vld [vmem:[%s315 + $0x10] sm:$0xff]
                  %322 = vst [vmem:[%s316 + $0x10] sm:$0xff] %v321
                  %v323 = vld [vmem:[%s315 + $0x1b0] sm:$0xff]
                  %324 = vst [vmem:[%s316 + $0x18] sm:$0xff] %v323
                  %v325 = vld [vmem:[%s315 + $0x1b8] sm:$0xff]
                  %326 = vst [vmem:[%s316 + $0x20] sm:$0xff] %v325
                  %v327 = vld [vmem:[%s315 + $0x1c0] sm:$0xff]
                  %328 = vst [vmem:[%s316 + $0x28] sm:$0xff] %v327
                $region90: #{tpu_custom_call.1} parent=84 // loop_footer
                  %s314 = sadd.s32 1, %s310
                $region91: #{tpu_custom_call.1} parent=84 // loop_footer_branch
                  %309 = sbr.rel target = $region87
                $region92: #{tpu_custom_call.1} parent=84 // loop_exit
                  _
              $region85: #{tpu_custom_call.1} parent=69 // pred_fallthru
                _
              // Predicated region
              $region93: #{tpu_custom_call.1} parent=69 // pred_check
                _
              $region94: #{tpu_custom_call.1} parent=69 // pred_check_branch
                %330 = sbr.rel target = $region96
              $region95: #{tpu_custom_call.1} parent=69 // pred_region
                _
              $region96: #{tpu_custom_call.1} parent=69 // pred_fallthru
                _
            $region70: #{tpu_custom_call.1} parent=65 // pred_fallthru
              _
            // Predicated region
            $region71: #{tpu_custom_call.1} parent=65 // pred_check
              _
            $region72: #{tpu_custom_call.1} parent=65 // pred_check_branch
              %284 = sbr.rel target = $region74
            $region73: #{tpu_custom_call.1} parent=65 // pred_region
              %s286 = ssub.s32 256, 1
              loop: start=0, step=1, limit=1
              $region75: #{tpu_custom_call.1} parent=73 // loop_pre_header
                _
              $region76: #{tpu_custom_call.1} parent=73 // loop_header
                %s288 = sphi 0, %s292
                %p289 = scmp.ge.s32.totalorder %s288, 1
                %s293 = sphi %s278, %s278
                %s294 = sphi %s271, %s271
              $region77: #{tpu_custom_call.1} parent=73 // loop_header_branch
                %291 = sbr.rel (%p289) target = $region81
              $region78: #{tpu_custom_call.1} parent=73 // loop_body
                %v295 = vld [vmem:[%s293] sm:%s286]
                %296 = vst [vmem:[%s294] sm:%s286] %v295
                %v297 = vld [vmem:[%s293 + $0x8] sm:%s286]
                %298 = vst [vmem:[%s294 + $0x8] sm:%s286] %v297
                %v299 = vld [vmem:[%s293 + $0x10] sm:%s286]
                %300 = vst [vmem:[%s294 + $0x10] sm:%s286] %v299
                %v301 = vld [vmem:[%s293 + $0x1b0] sm:%s286]
                %302 = vst [vmem:[%s294 + $0x18] sm:%s286] %v301
                %v303 = vld [vmem:[%s293 + $0x1b8] sm:%s286]
                %304 = vst [vmem:[%s294 + $0x20] sm:%s286] %v303
                %v305 = vld [vmem:[%s293 + $0x1c0] sm:%s286]
                %306 = vst [vmem:[%s294 + $0x28] sm:%s286] %v305
              $region79: #{tpu_custom_call.1} parent=73 // loop_footer
                %s292 = sadd.s32 1, %s288
              $region80: #{tpu_custom_call.1} parent=73 // loop_footer_branch
                %287 = sbr.rel target = $region76
              $region81: #{tpu_custom_call.1} parent=73 // loop_exit
                _
            $region74: #{tpu_custom_call.1} parent=65 // pred_fallthru
              _
          $region66: #{tpu_custom_call.1} parent=61 // pred_fallthru
            _
          %331 = vnop
        $region62: #{tpu_custom_call.1} parent=19 // pred_fallthru
          _
        // Predicated region
        $region97: #{tpu_custom_call.1} parent=19 // pred_check
          %p332 = pneg %p108
        $region98: #{tpu_custom_call.1} parent=19 // pred_check_branch
          %334 = sbr.rel (%p332) target = $region100
        $region99: #{tpu_custom_call.1} parent=19 // pred_region
          %s335 = sand.u32 %s98, 1
          %s336 = sand.u32 %s98, 1
          %s337 = smul.addr %s336, 48
          %s338 = scalar_lea.vmem [#allocation4], %s337
          %s339 = sadd.s32 %s22, 2
          %s340 = smul.u32 2, %s21
          %s341 = smul.addr %s339, 3
          %s342 = smul.addr %s340, 54
          %s343 = sadd.s32 %s341, %s342
          %s344 = smul.addr %s343, 8
          %s345 = scalar_lea.vmem %s2, %s344
          // Predicated region
          $region101: #{tpu_custom_call.1} parent=99 // pred_check
            _
          $region102: #{tpu_custom_call.1} parent=99 // pred_check_branch
            %347 = sbr.rel (0) target = $region104
          $region103: #{tpu_custom_call.1} parent=99 // pred_region
            // Predicated region
            $region105: #{tpu_custom_call.1} parent=103 // pred_check
              _
            $region106: #{tpu_custom_call.1} parent=103 // pred_check_branch
              %349 = sbr.rel (0) target = $region108
            $region107: #{tpu_custom_call.1} parent=103 // pred_region
              // Predicated region
              $region120: #{tpu_custom_call.1} parent=107 // pred_check
                _
              $region121: #{tpu_custom_call.1} parent=107 // pred_check_branch
                %375 = sbr.rel (0) target = $region123
              $region122: #{tpu_custom_call.1} parent=107 // pred_region
                loop: start=0, step=1, limit=1
                $region124: #{tpu_custom_call.1} parent=122 // loop_pre_header
                  _
                $region125: #{tpu_custom_call.1} parent=122 // loop_header
                  %s377 = sphi 0, %s381
                  %p378 = scmp.ge.s32.totalorder %s377, 1
                  %s382 = sphi %s345, %s345
                  %s383 = sphi %s338, %s338
                $region126: #{tpu_custom_call.1} parent=122 // loop_header_branch
                  %380 = sbr.rel (%p378) target = $region130
                $region127: #{tpu_custom_call.1} parent=122 // loop_body
                  %v384 = vld [vmem:[%s382] sm:$0xff]
                  %385 = vst [vmem:[%s383] sm:$0xff] %v384
                  %v386 = vld [vmem:[%s382 + $0x8] sm:$0xff]
                  %387 = vst [vmem:[%s383 + $0x8] sm:$0xff] %v386
                  %v388 = vld [vmem:[%s382 + $0x10] sm:$0xff]
                  %389 = vst [vmem:[%s383 + $0x10] sm:$0xff] %v388
                  %v390 = vld [vmem:[%s382 + $0x1b0] sm:$0xff]
                  %391 = vst [vmem:[%s383 + $0x18] sm:$0xff] %v390
                  %v392 = vld [vmem:[%s382 + $0x1b8] sm:$0xff]
                  %393 = vst [vmem:[%s383 + $0x20] sm:$0xff] %v392
                  %v394 = vld [vmem:[%s382 + $0x1c0] sm:$0xff]
                  %395 = vst [vmem:[%s383 + $0x28] sm:$0xff] %v394
                $region128: #{tpu_custom_call.1} parent=122 // loop_footer
                  %s381 = sadd.s32 1, %s377
                $region129: #{tpu_custom_call.1} parent=122 // loop_footer_branch
                  %376 = sbr.rel target = $region125
                $region130: #{tpu_custom_call.1} parent=122 // loop_exit
                  _
              $region123: #{tpu_custom_call.1} parent=107 // pred_fallthru
                _
              // Predicated region
              $region131: #{tpu_custom_call.1} parent=107 // pred_check
                _
              $region132: #{tpu_custom_call.1} parent=107 // pred_check_branch
                %397 = sbr.rel target = $region134
              $region133: #{tpu_custom_call.1} parent=107 // pred_region
                _
              $region134: #{tpu_custom_call.1} parent=107 // pred_fallthru
                _
            $region108: #{tpu_custom_call.1} parent=103 // pred_fallthru
              _
            // Predicated region
            $region109: #{tpu_custom_call.1} parent=103 // pred_check
              _
            $region110: #{tpu_custom_call.1} parent=103 // pred_check_branch
              %351 = sbr.rel target = $region112
            $region111: #{tpu_custom_call.1} parent=103 // pred_region
              %s353 = ssub.s32 256, 1
              loop: start=0, step=1, limit=1
              $region113: #{tpu_custom_call.1} parent=111 // loop_pre_header
                _
              $region114: #{tpu_custom_call.1} parent=111 // loop_header
                %s355 = sphi 0, %s359
                %p356 = scmp.ge.s32.totalorder %s355, 1
                %s360 = sphi %s345, %s345
                %s361 = sphi %s338, %s338
              $region115: #{tpu_custom_call.1} parent=111 // loop_header_branch
                %358 = sbr.rel (%p356) target = $region119
              $region116: #{tpu_custom_call.1} parent=111 // loop_body
                %v362 = vld [vmem:[%s360] sm:%s353]
                %363 = vst [vmem:[%s361] sm:%s353] %v362
                %v364 = vld [vmem:[%s360 + $0x8] sm:%s353]
                %365 = vst [vmem:[%s361 + $0x8] sm:%s353] %v364
                %v366 = vld [vmem:[%s360 + $0x10] sm:%s353]
                %367 = vst [vmem:[%s361 + $0x10] sm:%s353] %v366
                %v368 = vld [vmem:[%s360 + $0x1b0] sm:%s353]
                %369 = vst [vmem:[%s361 + $0x18] sm:%s353] %v368
                %v370 = vld [vmem:[%s360 + $0x1b8] sm:%s353]
                %371 = vst [vmem:[%s361 + $0x20] sm:%s353] %v370
                %v372 = vld [vmem:[%s360 + $0x1c0] sm:%s353]
                %373 = vst [vmem:[%s361 + $0x28] sm:%s353] %v372
              $region117: #{tpu_custom_call.1} parent=111 // loop_footer
                %s359 = sadd.s32 1, %s355
              $region118: #{tpu_custom_call.1} parent=111 // loop_footer_branch
                %354 = sbr.rel target = $region114
              $region119: #{tpu_custom_call.1} parent=111 // loop_exit
                _
            $region112: #{tpu_custom_call.1} parent=103 // pred_fallthru
              _
          $region104: #{tpu_custom_call.1} parent=99 // pred_fallthru
            _
          %398 = vnop
        $region100: #{tpu_custom_call.1} parent=19 // pred_fallthru
          _
      $region20: #{tpu_custom_call.1} parent=5 // pred_fallthru
        _
      %p399 = scmp.le.s32.totalorder 1, %s14
      %p400 = scmp.lt.s32.totalorder %s14, 17
      %p401 = pnand %p399, %p400
      %p402 = pneg %p401
      // Predicated region
      $region135: #{tpu_custom_call.1} parent=5 // pred_check
        _
      $region136: #{tpu_custom_call.1} parent=5 // pred_check_branch
        %404 = sbr.rel (%p401) target = $region138
      $region137: #{tpu_custom_call.1} parent=5 // pred_region
        %s405 = ssub.s32 %s14, 1
        %s406 = sand.u32 %s41, 1
        %s407 = sand.u32 %s41, 1
        %s408 = smul.addr %s407, 48
        %s409 = scalar_lea.vmem [#allocation2], %s408
        // Predicated region
        $region139: #{tpu_custom_call.1} parent=137 // pred_check
          %p410 = pneg %p54
        $region140: #{tpu_custom_call.1} parent=137 // pred_check_branch
          %412 = sbr.rel (%p410) target = $region142
        $region141: #{tpu_custom_call.1} parent=137 // pred_region
          _
        $region142: #{tpu_custom_call.1} parent=137 // pred_fallthru
          _
        %s413 = sand.u32 %s71, 1
        %s414 = sand.u32 %s71, 1
        %s415 = smul.addr %s414, 48
        %s416 = scalar_lea.vmem [#allocation3], %s415
        // Predicated region
        $region143: #{tpu_custom_call.1} parent=137 // pred_check
          %p417 = pneg %p84
        $region144: #{tpu_custom_call.1} parent=137 // pred_check_branch
          %419 = sbr.rel (%p417) target = $region146
        $region145: #{tpu_custom_call.1} parent=137 // pred_region
          _
        $region146: #{tpu_custom_call.1} parent=137 // pred_fallthru
          _
        %s420 = sand.u32 %s101, 1
        %s421 = sand.u32 %s101, 1
        %s422 = smul.addr %s421, 48
        %s423 = scalar_lea.vmem [#allocation4], %s422
        // Predicated region
        $region147: #{tpu_custom_call.1} parent=137 // pred_check
          %p424 = pneg %p114
        $region148: #{tpu_custom_call.1} parent=137 // pred_check_branch
          %426 = sbr.rel (%p424) target = $region150
        $region149: #{tpu_custom_call.1} parent=137 // pred_region
          _
        $region150: #{tpu_custom_call.1} parent=137 // pred_fallthru
          _
        %s427 = sand.u32 %s41, 1
        %s428 = sand.u32 %s41, 1
        %s429 = smul.addr %s428, 48
        %s430 = scalar_lea.vmem [#allocation2], %s429
        %p431 = pneg %p54
        %p432 = pneg %p51
        %s433 = sand.u32 %s71, 1
        %s434 = sand.u32 %s71, 1
        %s435 = smul.addr %s434, 48
        %s436 = scalar_lea.vmem [#allocation3], %s435
        %p437 = pneg %p84
        %p438 = pneg %p81
        %s439 = sand.u32 %s101, 1
        %s440 = sand.u32 %s101, 1
        %s441 = smul.addr %s440, 48
        %s442 = scalar_lea.vmem [#allocation4], %s441
        %p443 = pneg %p114
        %p444 = pneg %p111
        %p445 = pneg %p135
        %p446 = pneg %p132
        %p447 = pneg %p156
        %p448 = pneg %p153
        %p449 = pneg %p177
        %p450 = pneg %p174
        %s451 = smul.u32 2, %s23
        %s452 = sadd.s32 %s24, 1
        %s453 = smul.u32 2, %s23
        %s454 = sadd.s32 %s24, 2
        %s455 = smul.u32 2, %s23
        %p456 = scmp.eq.s32.totalorder %s23, 0
        %p457 = scmp.eq.s32.totalorder %s24, 0
        %p458 = pnand %p456, %p457
        %p459 = pneg %p458
        // Predicated region
        $region151: #{tpu_custom_call.1} parent=137 // pred_check
          _
        $region152: #{tpu_custom_call.1} parent=137 // pred_check_branch
          %461 = sbr.rel (%p458) target = $region154
        $region153: #{tpu_custom_call.1} parent=137 // pred_region
          %462 = vst [vmem:[#allocation5] sm:$0x1] 0.0
          %463 = vst [vmem:[#allocation7] sm:$0x1] 0.0
        $region154: #{tpu_custom_call.1} parent=137 // pred_fallthru
          _
        %v464 = vld [vmem:[%s409] sm:$0xff]
        %v465 = vld [vmem:[%s409 + $0x8] sm:$0xff]
        %v466 = vld [vmem:[%s3] sm:$0xf]
        %v467 = vld [vmem:[%s409 + $0x1] sm:$0xff]
        %v468 = vld [vmem:[%s409 + $0x9] sm:$0xff]
        %v469 = vld [vmem:[%s3 + $0x4] sm:$0xf]
        %vm470 = vcmask 31744
        %v472 = vsel %vm470, %v467, 0
        %v475 = vsel %vm470, %v468, 0
        %vm477 = vcmask 1043456
        %v479 = vsel %vm477, %v469, 0
        %481 = vmatpush.msra.mxu0 0.0
        %482 = vmatpush.msra.mxu0 0.0
        %483 = vmatpush.msra.mxu0 0.0
        %484 = vmatpush.msra.mxu0 0.0
        %485 = vmatpush.msra.mxu0 0.0
        %486 = vmatpush.msra.mxu0 0.0
        %487 = vmatpush.msra.mxu0 0.0
        %488 = vmatpush.msra.mxu0 0.0
        %489 = vmatpush.msra.mxu0 0.0
        %490 = vmatpush.msra.mxu0 0.0
        %491 = vmatpush.msra.mxu0 0.0
        %492 = vmatpush.msra.mxu0 0.0
        %493 = vmatpush.msra.mxu0 0.0
        %494 = vmatpush.msra.mxu0 0.0
        %495 = vmatpush.msra.mxu0 0.0
        %496 = vmatpush.msra.mxu0 %v479
        %497 = vmatmul.f32.gmra.mxu0 %v472
        %v498 = vpop.f32.mrf.mxu0
        %v499 = vadd.f32 0.0, %v498
        %500 = vmatmul.f32.gmra.mxu0 %v475
        %v501 = vpop.f32.mrf.mxu0
        %v502 = vadd.f32 0.0, %v501
        %503 = vdwg.mxu0
        %v505 = vsel %vm470, %v464, 0
        %v508 = vsel %vm470, %v465, 0
        %v511 = vsel %vm477, %v466, 0
        %513 = vmatpush.msra.mxu0 0.0
        %514 = vmatpush.msra.mxu0 0.0
        %515 = vmatpush.msra.mxu0 0.0
        %516 = vmatpush.msra.mxu0 0.0
        %517 = vmatpush.msra.mxu0 0.0
        %518 = vmatpush.msra.mxu0 0.0
        %519 = vmatpush.msra.mxu0 0.0
        %520 = vmatpush.msra.mxu0 0.0
        %521 = vmatpush.msra.mxu0 0.0
        %522 = vmatpush.msra.mxu0 0.0
        %523 = vmatpush.msra.mxu0 0.0
        %524 = vmatpush.msra.mxu0 0.0
        %525 = vmatpush.msra.mxu0 0.0
        %526 = vmatpush.msra.mxu0 0.0
        %527 = vmatpush.msra.mxu0 0.0
        %528 = vmatpush.msra.mxu0 %v511
        %529 = vmatmul.f32.gmra.mxu0 %v505
        %v530 = vpop.f32.mrf.mxu0
        %v531 = vadd.f32 %v499, %v530
        %532 = vmatmul.f32.gmra.mxu0 %v508
        %v533 = vpop.f32.mrf.mxu0
        %v534 = vadd.f32 %v502, %v533
        %535 = vdwg.mxu0
        %v536 = vld [vmem:[%s409 + $0x2] sm:$0xff]
        %v537 = vld [vmem:[%s409 + $0xa] sm:$0xff]
        %v538 = vld [vmem:[%s3 + $0x8] sm:$0xf]
        %v540 = vsel %vm470, %v536, 0
        %v543 = vsel %vm470, %v537, 0
        %v546 = vsel %vm477, %v538, 0
        %548 = vmatpush.msra.mxu0 0.0
        %549 = vmatpush.msra.mxu0 0.0
        %550 = vmatpush.msra.mxu0 0.0
        %551 = vmatpush.msra.mxu0 0.0
        %552 = vmatpush.msra.mxu0 0.0
        %553 = vmatpush.msra.mxu0 0.0
        %554 = vmatpush.msra.mxu0 0.0
        %555 = vmatpush.msra.mxu0 0.0
        %556 = vmatpush.msra.mxu0 0.0
        %557 = vmatpush.msra.mxu0 0.0
        %558 = vmatpush.msra.mxu0 0.0
        %559 = vmatpush.msra.mxu0 0.0
        %560 = vmatpush.msra.mxu0 0.0
        %561 = vmatpush.msra.mxu0 0.0
        %562 = vmatpush.msra.mxu0 0.0
        %563 = vmatpush.msra.mxu0 %v546
        %564 = vmatmul.f32.gmra.mxu0 %v540
        %v565 = vpop.f32.mrf.mxu0
        %v566 = vadd.f32 0.0, %v565
        %567 = vmatmul.f32.gmra.mxu0 %v543
        %v568 = vpop.f32.mrf.mxu0
        %v569 = vadd.f32 0.0, %v568
        %570 = vdwg.mxu0
        %v571 = vadd.f32 %v531, %v566
        %v572 = vadd.f32 %v534, %v569
        %v573 = vld [vmem:[%s416] sm:$0xff]
        %v574 = vld [vmem:[%s416 + $0x8] sm:$0xff]
        %v575 = vld [vmem:[%s3 + $0xc] sm:$0xf]
        %v577 = vsel %vm470, %v573, 0
        %v580 = vsel %vm470, %v574, 0
        %v583 = vsel %vm477, %v575, 0
        %585 = vmatpush.msra.mxu0 0.0
        %586 = vmatpush.msra.mxu0 0.0
        %587 = vmatpush.msra.mxu0 0.0
        %588 = vmatpush.msra.mxu0 0.0
        %589 = vmatpush.msra.mxu0 0.0
        %590 = vmatpush.msra.mxu0 0.0
        %591 = vmatpush.msra.mxu0 0.0
        %592 = vmatpush.msra.mxu0 0.0
        %593 = vmatpush.msra.mxu0 0.0
        %594 = vmatpush.msra.mxu0 0.0
        %595 = vmatpush.msra.mxu0 0.0
        %596 = vmatpush.msra.mxu0 0.0
        %597 = vmatpush.msra.mxu0 0.0
        %598 = vmatpush.msra.mxu0 0.0
        %599 = vmatpush.msra.mxu0 0.0
        %600 = vmatpush.msra.mxu0 %v583
        %601 = vmatmul.f32.gmra.mxu0 %v577
        %v602 = vpop.f32.mrf.mxu0
        %v603 = vadd.f32 0.0, %v602
        %604 = vmatmul.f32.gmra.mxu0 %v580
        %v605 = vpop.f32.mrf.mxu0
        %v606 = vadd.f32 0.0, %v605
        %607 = vdwg.mxu0
        %v608 = vadd.f32 %v571, %v603
        %v609 = vadd.f32 %v572, %v606
        %v610 = vld [vmem:[%s416 + $0x1] sm:$0xff]
        %v611 = vld [vmem:[%s416 + $0x9] sm:$0xff]
        %v612 = vld [vmem:[%s3 + $0x10] sm:$0xf]
        %v614 = vsel %vm470, %v610, 0
        %v617 = vsel %vm470, %v611, 0
        %v620 = vsel %vm477, %v612, 0
        %622 = vmatpush.msra.mxu0 0.0
        %623 = vmatpush.msra.mxu0 0.0
        %624 = vmatpush.msra.mxu0 0.0
        %625 = vmatpush.msra.mxu0 0.0
        %626 = vmatpush.msra.mxu0 0.0
        %627 = vmatpush.msra.mxu0 0.0
        %628 = vmatpush.msra.mxu0 0.0
        %629 = vmatpush.msra.mxu0 0.0
        %630 = vmatpush.msra.mxu0 0.0
        %631 = vmatpush.msra.mxu0 0.0
        %632 = vmatpush.msra.mxu0 0.0
        %633 = vmatpush.msra.mxu0 0.0
        %634 = vmatpush.msra.mxu0 0.0
        %635 = vmatpush.msra.mxu0 0.0
        %636 = vmatpush.msra.mxu0 0.0
        %637 = vmatpush.msra.mxu0 %v620
        %638 = vmatmul.f32.gmra.mxu0 %v614
        %v639 = vpop.f32.mrf.mxu0
        %v640 = vadd.f32 0.0, %v639
        %641 = vmatmul.f32.gmra.mxu0 %v617
        %v642 = vpop.f32.mrf.mxu0
        %v643 = vadd.f32 0.0, %v642
        %644 = vdwg.mxu0
        %v645 = vadd.f32 %v608, %v640
        %v646 = vadd.f32 %v609, %v643
        %v647 = vld [vmem:[%s416 + $0x2] sm:$0xff]
        %v648 = vld [vmem:[%s416 + $0xa] sm:$0xff]
        %v649 = vld [vmem:[%s3 + $0x14] sm:$0xf]
        %v651 = vsel %vm470, %v647, 0
        %v654 = vsel %vm470, %v648, 0
        %v657 = vsel %vm477, %v649, 0
        %659 = vmatpush.msra.mxu0 0.0
        %660 = vmatpush.msra.mxu0 0.0
        %661 = vmatpush.msra.mxu0 0.0
        %662 = vmatpush.msra.mxu0 0.0
        %663 = vmatpush.msra.mxu0 0.0
        %664 = vmatpush.msra.mxu0 0.0
        %665 = vmatpush.msra.mxu0 0.0
        %666 = vmatpush.msra.mxu0 0.0
        %667 = vmatpush.msra.mxu0 0.0
        %668 = vmatpush.msra.mxu0 0.0
        %669 = vmatpush.msra.mxu0 0.0
        %670 = vmatpush.msra.mxu0 0.0
        %671 = vmatpush.msra.mxu0 0.0
        %672 = vmatpush.msra.mxu0 0.0
        %673 = vmatpush.msra.mxu0 0.0
        %674 = vmatpush.msra.mxu0 %v657
        %675 = vmatmul.f32.gmra.mxu0 %v651
        %v676 = vpop.f32.mrf.mxu0
        %v677 = vadd.f32 0.0, %v676
        %678 = vmatmul.f32.gmra.mxu0 %v654
        %v679 = vpop.f32.mrf.mxu0
        %v680 = vadd.f32 0.0, %v679
        %681 = vdwg.mxu0
        %v682 = vadd.f32 %v645, %v677
        %v683 = vadd.f32 %v646, %v680
        %v684 = vld [vmem:[%s423] sm:$0xff]
        %v685 = vld [vmem:[%s423 + $0x8] sm:$0xff]
        %v686 = vld [vmem:[%s3 + $0x18] sm:$0xf]
        %v688 = vsel %vm470, %v684, 0
        %v691 = vsel %vm470, %v685, 0
        %v694 = vsel %vm477, %v686, 0
        %696 = vmatpush.msra.mxu0 0.0
        %697 = vmatpush.msra.mxu0 0.0
        %698 = vmatpush.msra.mxu0 0.0
        %699 = vmatpush.msra.mxu0 0.0
        %700 = vmatpush.msra.mxu0 0.0
        %701 = vmatpush.msra.mxu0 0.0
        %702 = vmatpush.msra.mxu0 0.0
        %703 = vmatpush.msra.mxu0 0.0
        %704 = vmatpush.msra.mxu0 0.0
        %705 = vmatpush.msra.mxu0 0.0
        %706 = vmatpush.msra.mxu0 0.0
        %707 = vmatpush.msra.mxu0 0.0
        %708 = vmatpush.msra.mxu0 0.0
        %709 = vmatpush.msra.mxu0 0.0
        %710 = vmatpush.msra.mxu0 0.0
        %711 = vmatpush.msra.mxu0 %v694
        %712 = vmatmul.f32.gmra.mxu0 %v688
        %v713 = vpop.f32.mrf.mxu0
        %v714 = vadd.f32 0.0, %v713
        %715 = vmatmul.f32.gmra.mxu0 %v691
        %v716 = vpop.f32.mrf.mxu0
        %v717 = vadd.f32 0.0, %v716
        %718 = vdwg.mxu0
        %v719 = vadd.f32 %v682, %v714
        %v720 = vadd.f32 %v683, %v717
        %v721 = vld [vmem:[%s423 + $0x1] sm:$0xff]
        %v722 = vld [vmem:[%s423 + $0x9] sm:$0xff]
        %v723 = vld [vmem:[%s3 + $0x1c] sm:$0xf]
        %v725 = vsel %vm470, %v721, 0
        %v728 = vsel %vm470, %v722, 0
        %v731 = vsel %vm477, %v723, 0
        %733 = vmatpush.msra.mxu0 0.0
        %734 = vmatpush.msra.mxu0 0.0
        %735 = vmatpush.msra.mxu0 0.0
        %736 = vmatpush.msra.mxu0 0.0
        %737 = vmatpush.msra.mxu0 0.0
        %738 = vmatpush.msra.mxu0 0.0
        %739 = vmatpush.msra.mxu0 0.0
        %740 = vmatpush.msra.mxu0 0.0
        %741 = vmatpush.msra.mxu0 0.0
        %742 = vmatpush.msra.mxu0 0.0
        %743 = vmatpush.msra.mxu0 0.0
        %744 = vmatpush.msra.mxu0 0.0
        %745 = vmatpush.msra.mxu0 0.0
        %746 = vmatpush.msra.mxu0 0.0
        %747 = vmatpush.msra.mxu0 0.0
        %748 = vmatpush.msra.mxu0 %v731
        %749 = vmatmul.f32.gmra.mxu0 %v725
        %v750 = vpop.f32.mrf.mxu0
        %v751 = vadd.f32 0.0, %v750
        %752 = vmatmul.f32.gmra.mxu0 %v728
        %v753 = vpop.f32.mrf.mxu0
        %v754 = vadd.f32 0.0, %v753
        %755 = vdwg.mxu0
        %v756 = vadd.f32 %v719, %v751
        %v757 = vadd.f32 %v720, %v754
        %v758 = vld [vmem:[%s423 + $0x2] sm:$0xff]
        %v759 = vld [vmem:[%s423 + $0xa] sm:$0xff]
        %v760 = vld [vmem:[%s3 + $0x20] sm:$0xf]
        %v762 = vsel %vm470, %v758, 0
        %v765 = vsel %vm470, %v759, 0
        %v768 = vsel %vm477, %v760, 0
        %770 = vmatpush.msra.mxu0 0.0
        %771 = vmatpush.msra.mxu0 0.0
        %772 = vmatpush.msra.mxu0 0.0
        %773 = vmatpush.msra.mxu0 0.0
        %774 = vmatpush.msra.mxu0 0.0
        %775 = vmatpush.msra.mxu0 0.0
        %776 = vmatpush.msra.mxu0 0.0
        %777 = vmatpush.msra.mxu0 0.0
        %778 = vmatpush.msra.mxu0 0.0
        %779 = vmatpush.msra.mxu0 0.0
        %780 = vmatpush.msra.mxu0 0.0
        %781 = vmatpush.msra.mxu0 0.0
        %782 = vmatpush.msra.mxu0 0.0
        %783 = vmatpush.msra.mxu0 0.0
        %784 = vmatpush.msra.mxu0 0.0
        %785 = vmatpush.msra.mxu0 %v768
        %786 = vmatmul.f32.gmra.mxu0 %v762
        %v787 = vpop.f32.mrf.mxu0
        %v788 = vadd.f32 0.0, %v787
        %789 = vmatmul.f32.gmra.mxu0 %v765
        %v790 = vpop.f32.mrf.mxu0
        %v791 = vadd.f32 0.0, %v790
        %792 = vdwg.mxu0
        %v793 = vadd.f32 %v756, %v788
        %v794 = vadd.f32 %v757, %v791
        %v795 = vadd.f32 %v793, %v794
        %v796 = vrot.slane %v795, 4
        %v797 = vadd.f32 %v795, %v796
        %v798 = vrot.slane %v797, 2
        %v799 = vadd.f32 %v797, %v798
        %v800 = vrot.slane %v799, 1
        %v801 = vadd.f32 %v799, %v800
        %v802 = vadd.f32 %v801, 0.0
        %v803 = vmul.f32 %v793, %v793
        %v804 = vmul.f32 %v794, %v794
        %v805 = vadd.f32 %v803, %v804
        %v806 = vrot.slane %v805, 4
        %v807 = vadd.f32 %v805, %v806
        %v808 = vrot.slane %v807, 2
        %v809 = vadd.f32 %v807, %v808
        %v810 = vrot.slane %v809, 1
        %v811 = vadd.f32 %v809, %v810
        %v812 = vadd.f32 %v811, 0.0
        %s813 = scalar_lea.vmem %s409, 24 [#allocation2]
        %v814 = vld [vmem:[%s813] sm:$0xff]
        %v815 = vld [vmem:[%s813 + $0x8] sm:$0xff]
        %v816 = vld [vmem:[%s813 + $0x1] sm:$0xff]
        %v817 = vld [vmem:[%s813 + $0x9] sm:$0xff]
        %v819 = vsel %vm470, %v816, 0
        %v822 = vsel %vm470, %v817, 0
        %824 = vmatpush.msra.mxu0 0.0
        %825 = vmatpush.msra.mxu0 0.0
        %826 = vmatpush.msra.mxu0 0.0
        %827 = vmatpush.msra.mxu0 0.0
        %828 = vmatpush.msra.mxu0 0.0
        %829 = vmatpush.msra.mxu0 0.0
        %830 = vmatpush.msra.mxu0 0.0
        %831 = vmatpush.msra.mxu0 0.0
        %832 = vmatpush.msra.mxu0 0.0
        %833 = vmatpush.msra.mxu0 0.0
        %834 = vmatpush.msra.mxu0 0.0
        %835 = vmatpush.msra.mxu0 0.0
        %836 = vmatpush.msra.mxu0 0.0
        %837 = vmatpush.msra.mxu0 0.0
        %838 = vmatpush.msra.mxu0 0.0
        %839 = vmatpush.msra.mxu0 %v479
        %840 = vmatmul.f32.gmra.mxu0 %v819
        %v841 = vpop.f32.mrf.mxu0
        %v842 = vadd.f32 0.0, %v841
        %843 = vmatmul.f32.gmra.mxu0 %v822
        %v844 = vpop.f32.mrf.mxu0
        %v845 = vadd.f32 0.0, %v844
        %846 = vdwg.mxu0
        %v848 = vsel %vm470, %v814, 0
        %v851 = vsel %vm470, %v815, 0
        %853 = vmatpush.msra.mxu0 0.0
        %854 = vmatpush.msra.mxu0 0.0
        %855 = vmatpush.msra.mxu0 0.0
        %856 = vmatpush.msra.mxu0 0.0
        %857 = vmatpush.msra.mxu0 0.0
        %858 = vmatpush.msra.mxu0 0.0
        %859 = vmatpush.msra.mxu0 0.0
        %860 = vmatpush.msra.mxu0 0.0
        %861 = vmatpush.msra.mxu0 0.0
        %862 = vmatpush.msra.mxu0 0.0
        %863 = vmatpush.msra.mxu0 0.0
        %864 = vmatpush.msra.mxu0 0.0
        %865 = vmatpush.msra.mxu0 0.0
        %866 = vmatpush.msra.mxu0 0.0
        %867 = vmatpush.msra.mxu0 0.0
        %868 = vmatpush.msra.mxu0 %v511
        %869 = vmatmul.f32.gmra.mxu0 %v848
        %v870 = vpop.f32.mrf.mxu0
        %v871 = vadd.f32 %v842, %v870
        %872 = vmatmul.f32.gmra.mxu0 %v851
        %v873 = vpop.f32.mrf.mxu0
        %v874 = vadd.f32 %v845, %v873
        %875 = vdwg.mxu0
        %v876 = vld [vmem:[%s813 + $0x2] sm:$0xff]
        %v877 = vld [vmem:[%s813 + $0xa] sm:$0xff]
        %v879 = vsel %vm470, %v876, 0
        %v882 = vsel %vm470, %v877, 0
        %884 = vmatpush.msra.mxu0 0.0
        %885 = vmatpush.msra.mxu0 0.0
        %886 = vmatpush.msra.mxu0 0.0
        %887 = vmatpush.msra.mxu0 0.0
        %888 = vmatpush.msra.mxu0 0.0
        %889 = vmatpush.msra.mxu0 0.0
        %890 = vmatpush.msra.mxu0 0.0
        %891 = vmatpush.msra.mxu0 0.0
        %892 = vmatpush.msra.mxu0 0.0
        %893 = vmatpush.msra.mxu0 0.0
        %894 = vmatpush.msra.mxu0 0.0
        %895 = vmatpush.msra.mxu0 0.0
        %896 = vmatpush.msra.mxu0 0.0
        %897 = vmatpush.msra.mxu0 0.0
        %898 = vmatpush.msra.mxu0 0.0
        %899 = vmatpush.msra.mxu0 %v546
        %900 = vmatmul.f32.gmra.mxu0 %v879
        %v901 = vpop.f32.mrf.mxu0
        %v902 = vadd.f32 0.0, %v901
        %903 = vmatmul.f32.gmra.mxu0 %v882
        %v904 = vpop.f32.mrf.mxu0
        %v905 = vadd.f32 0.0, %v904
        %906 = vdwg.mxu0
        %v907 = vadd.f32 %v871, %v902
        %v908 = vadd.f32 %v874, %v905
        %s909 = scalar_lea.vmem %s416, 24 [#allocation3]
        %v910 = vld [vmem:[%s909] sm:$0xff]
        %v911 = vld [vmem:[%s909 + $0x8] sm:$0xff]
        %v913 = vsel %vm470, %v910, 0
        %v916 = vsel %vm470, %v911, 0
        %918 = vmatpush.msra.mxu0 0.0
        %919 = vmatpush.msra.mxu0 0.0
        %920 = vmatpush.msra.mxu0 0.0
        %921 = vmatpush.msra.mxu0 0.0
        %922 = vmatpush.msra.mxu0 0.0
        %923 = vmatpush.msra.mxu0 0.0
        %924 = vmatpush.msra.mxu0 0.0
        %925 = vmatpush.msra.mxu0 0.0
        %926 = vmatpush.msra.mxu0 0.0
        %927 = vmatpush.msra.mxu0 0.0
        %928 = vmatpush.msra.mxu0 0.0
        %929 = vmatpush.msra.mxu0 0.0
        %930 = vmatpush.msra.mxu0 0.0
        %931 = vmatpush.msra.mxu0 0.0
        %932 = vmatpush.msra.mxu0 0.0
        %933 = vmatpush.msra.mxu0 %v583
        %934 = vmatmul.f32.gmra.mxu0 %v913
        %v935 = vpop.f32.mrf.mxu0
        %v936 = vadd.f32 0.0, %v935
        %937 = vmatmul.f32.gmra.mxu0 %v916
        %v938 = vpop.f32.mrf.mxu0
        %v939 = vadd.f32 0.0, %v938
        %940 = vdwg.mxu0
        %v941 = vadd.f32 %v907, %v936
        %v942 = vadd.f32 %v908, %v939
        %v943 = vld [vmem:[%s909 + $0x1] sm:$0xff]
        %v944 = vld [vmem:[%s909 + $0x9] sm:$0xff]
        %v946 = vsel %vm470, %v943, 0
        %v949 = vsel %vm470, %v944, 0
        %951 = vmatpush.msra.mxu0 0.0
        %952 = vmatpush.msra.mxu0 0.0
        %953 = vmatpush.msra.mxu0 0.0
        %954 = vmatpush.msra.mxu0 0.0
        %955 = vmatpush.msra.mxu0 0.0
        %956 = vmatpush.msra.mxu0 0.0
        %957 = vmatpush.msra.mxu0 0.0
        %958 = vmatpush.msra.mxu0 0.0
        %959 = vmatpush.msra.mxu0 0.0
        %960 = vmatpush.msra.mxu0 0.0
        %961 = vmatpush.msra.mxu0 0.0
        %962 = vmatpush.msra.mxu0 0.0
        %963 = vmatpush.msra.mxu0 0.0
        %964 = vmatpush.msra.mxu0 0.0
        %965 = vmatpush.msra.mxu0 0.0
        %966 = vmatpush.msra.mxu0 %v620
        %967 = vmatmul.f32.gmra.mxu0 %v946
        %v968 = vpop.f32.mrf.mxu0
        %v969 = vadd.f32 0.0, %v968
        %970 = vmatmul.f32.gmra.mxu0 %v949
        %v971 = vpop.f32.mrf.mxu0
        %v972 = vadd.f32 0.0, %v971
        %973 = vdwg.mxu0
        %v974 = vadd.f32 %v941, %v969
        %v975 = vadd.f32 %v942, %v972
        %v976 = vld [vmem:[%s909 + $0x2] sm:$0xff]
        %v977 = vld [vmem:[%s909 + $0xa] sm:$0xff]
        %v979 = vsel %vm470, %v976, 0
        %v982 = vsel %vm470, %v977, 0
        %984 = vmatpush.msra.mxu0 0.0
        %985 = vmatpush.msra.mxu0 0.0
        %986 = vmatpush.msra.mxu0 0.0
        %987 = vmatpush.msra.mxu0 0.0
        %988 = vmatpush.msra.mxu0 0.0
        %989 = vmatpush.msra.mxu0 0.0
        %990 = vmatpush.msra.mxu0 0.0
        %991 = vmatpush.msra.mxu0 0.0
        %992 = vmatpush.msra.mxu0 0.0
        %993 = vmatpush.msra.mxu0 0.0
        %994 = vmatpush.msra.mxu0 0.0
        %995 = vmatpush.msra.mxu0 0.0
        %996 = vmatpush.msra.mxu0 0.0
        %997 = vmatpush.msra.mxu0 0.0
        %998 = vmatpush.msra.mxu0 0.0
        %999 = vmatpush.msra.mxu0 %v657
        %1000 = vmatmul.f32.gmra.mxu0 %v979
        %v1001 = vpop.f32.mrf.mxu0
        %v1002 = vadd.f32 0.0, %v1001
        %1003 = vmatmul.f32.gmra.mxu0 %v982
        %v1004 = vpop.f32.mrf.mxu0
        %v1005 = vadd.f32 0.0, %v1004
        %1006 = vdwg.mxu0
        %v1007 = vadd.f32 %v974, %v1002
        %v1008 = vadd.f32 %v975, %v1005
        %s1009 = scalar_lea.vmem %s423, 24 [#allocation4]
        %v1010 = vld [vmem:[%s1009] sm:$0xff]
        %v1011 = vld [vmem:[%s1009 + $0x8] sm:$0xff]
        %v1013 = vsel %vm470, %v1010, 0
        %v1016 = vsel %vm470, %v1011, 0
        %1018 = vmatpush.msra.mxu0 0.0
        %1019 = vmatpush.msra.mxu0 0.0
        %1020 = vmatpush.msra.mxu0 0.0
        %1021 = vmatpush.msra.mxu0 0.0
        %1022 = vmatpush.msra.mxu0 0.0
        %1023 = vmatpush.msra.mxu0 0.0
        %1024 = vmatpush.msra.mxu0 0.0
        %1025 = vmatpush.msra.mxu0 0.0
        %1026 = vmatpush.msra.mxu0 0.0
        %1027 = vmatpush.msra.mxu0 0.0
        %1028 = vmatpush.msra.mxu0 0.0
        %1029 = vmatpush.msra.mxu0 0.0
        %1030 = vmatpush.msra.mxu0 0.0
        %1031 = vmatpush.msra.mxu0 0.0
        %1032 = vmatpush.msra.mxu0 0.0
        %1033 = vmatpush.msra.mxu0 %v694
        %1034 = vmatmul.f32.gmra.mxu0 %v1013
        %v1035 = vpop.f32.mrf.mxu0
        %v1036 = vadd.f32 0.0, %v1035
        %1037 = vmatmul.f32.gmra.mxu0 %v1016
        %v1038 = vpop.f32.mrf.mxu0
        %v1039 = vadd.f32 0.0, %v1038
        %1040 = vdwg.mxu0
        %v1041 = vadd.f32 %v1007, %v1036
        %v1042 = vadd.f32 %v1008, %v1039
        %v1043 = vld [vmem:[%s1009 + $0x1] sm:$0xff]
        %v1044 = vld [vmem:[%s1009 + $0x9] sm:$0xff]
        %v1046 = vsel %vm470, %v1043, 0
        %v1049 = vsel %vm470, %v1044, 0
        %1051 = vmatpush.msra.mxu0 0.0
        %1052 = vmatpush.msra.mxu0 0.0
        %1053 = vmatpush.msra.mxu0 0.0
        %1054 = vmatpush.msra.mxu0 0.0
        %1055 = vmatpush.msra.mxu0 0.0
        %1056 = vmatpush.msra.mxu0 0.0
        %1057 = vmatpush.msra.mxu0 0.0
        %1058 = vmatpush.msra.mxu0 0.0
        %1059 = vmatpush.msra.mxu0 0.0
        %1060 = vmatpush.msra.mxu0 0.0
        %1061 = vmatpush.msra.mxu0 0.0
        %1062 = vmatpush.msra.mxu0 0.0
        %1063 = vmatpush.msra.mxu0 0.0
        %1064 = vmatpush.msra.mxu0 0.0
        %1065 = vmatpush.msra.mxu0 0.0
        %1066 = vmatpush.msra.mxu0 %v731
        %1067 = vmatmul.f32.gmra.mxu0 %v1046
        %v1068 = vpop.f32.mrf.mxu0
        %v1069 = vadd.f32 0.0, %v1068
        %1070 = vmatmul.f32.gmra.mxu0 %v1049
        %v1071 = vpop.f32.mrf.mxu0
        %v1072 = vadd.f32 0.0, %v1071
        %1073 = vdwg.mxu0
        %v1074 = vadd.f32 %v1041, %v1069
        %v1075 = vadd.f32 %v1042, %v1072
        %v1076 = vld [vmem:[%s1009 + $0x2] sm:$0xff]
        %v1077 = vld [vmem:[%s1009 + $0xa] sm:$0xff]
        %v1079 = vsel %vm470, %v1076, 0
        %v1082 = vsel %vm470, %v1077, 0
        %1084 = vmatpush.msra.mxu0 0.0
        %1085 = vmatpush.msra.mxu0 0.0
        %1086 = vmatpush.msra.mxu0 0.0
        %1087 = vmatpush.msra.mxu0 0.0
        %1088 = vmatpush.msra.mxu0 0.0
        %1089 = vmatpush.msra.mxu0 0.0
        %1090 = vmatpush.msra.mxu0 0.0
        %1091 = vmatpush.msra.mxu0 0.0
        %1092 = vmatpush.msra.mxu0 0.0
        %1093 = vmatpush.msra.mxu0 0.0
        %1094 = vmatpush.msra.mxu0 0.0
        %1095 = vmatpush.msra.mxu0 0.0
        %1096 = vmatpush.msra.mxu0 0.0
        %1097 = vmatpush.msra.mxu0 0.0
        %1098 = vmatpush.msra.mxu0 0.0
        %1099 = vmatpush.msra.mxu0 %v768
        %1100 = vmatmul.f32.gmra.mxu0 %v1079
        %v1101 = vpop.f32.mrf.mxu0
        %v1102 = vadd.f32 0.0, %v1101
        %1103 = vmatmul.f32.gmra.mxu0 %v1082
        %v1104 = vpop.f32.mrf.mxu0
        %v1105 = vadd.f32 0.0, %v1104
        %1106 = vdwg.mxu0
        %v1107 = vadd.f32 %v1074, %v1102
        %v1108 = vadd.f32 %v1075, %v1105
        %v1109 = vadd.f32 %v1107, %v1108
        %v1110 = vrot.slane %v1109, 4
        %v1111 = vadd.f32 %v1109, %v1110
        %v1112 = vrot.slane %v1111, 2
        %v1113 = vadd.f32 %v1111, %v1112
        %v1114 = vrot.slane %v1113, 1
        %v1115 = vadd.f32 %v1113, %v1114
        %v1116 = vadd.f32 %v802, %v1115
        %v1117 = vmul.f32 %v1107, %v1107
        %v1118 = vmul.f32 %v1108, %v1108
        %v1119 = vadd.f32 %v1117, %v1118
        %v1120 = vrot.slane %v1119, 4
        %v1121 = vadd.f32 %v1119, %v1120
        %v1122 = vrot.slane %v1121, 2
        %v1123 = vadd.f32 %v1121, %v1122
        %v1124 = vrot.slane %v1123, 1
        %v1125 = vadd.f32 %v1123, %v1124
        %v1126 = vadd.f32 %v812, %v1125
        %v1127 = vld [vmem:[#allocation5] sm:$0x1]
        %v1128 = vadd.f32 %v1127, %v1116
        %1129 = vst [vmem:[#allocation5] sm:$0x1] %v1128
        %v1130 = vld [vmem:[#allocation7] sm:$0x1]
        %v1131 = vadd.f32 %v1130, %v1126
        %1132 = vst [vmem:[#allocation7] sm:$0x1] %v1131
        // Predicated region
        $region155: #{tpu_custom_call.1} parent=137 // pred_check
          %p1133 = pneg %p153
        $region156: #{tpu_custom_call.1} parent=137 // pred_check_branch
          %1135 = sbr.rel (%p1133) target = $region158
        $region157: #{tpu_custom_call.1} parent=137 // pred_region
          %1137 = vsyncadd [#allocation6], 0
          %s1139 = sshll.u32 [#allocation5], 4
          %s1140 = int_to_ptr.vmem [resolvable:$true] %s1139
          %s1141 = sshll.u32 %s4, 4
          %s1142 = int_to_ptr.hbm [resolvable:$true] %s1141
          %1144 = dma.vmem_to_hbm [thread:$0]  %s1140, 16, %s1142, [#allocation6]
        $region158: #{tpu_custom_call.1} parent=137 // pred_fallthru
          _
        // Predicated region
        $region159: #{tpu_custom_call.1} parent=137 // pred_check
          %p1145 = pneg %p174
        $region160: #{tpu_custom_call.1} parent=137 // pred_check_branch
          %1147 = sbr.rel (%p1145) target = $region162
        $region161: #{tpu_custom_call.1} parent=137 // pred_region
          %1149 = vsyncadd [#allocation8], 0
          %s1151 = sshll.u32 [#allocation7], 4
          %s1152 = int_to_ptr.vmem [resolvable:$true] %s1151
          %s1153 = sshll.u32 %s5, 4
          %s1154 = int_to_ptr.hbm [resolvable:$true] %s1153
          %1156 = dma.vmem_to_hbm [thread:$0]  %s1152, 16, %s1154, [#allocation8]
        $region162: #{tpu_custom_call.1} parent=137 // pred_fallthru
          _
        // Predicated region
        $region163: #{tpu_custom_call.1} parent=137 // pred_check
          %p1157 = pneg %p153
        $region164: #{tpu_custom_call.1} parent=137 // pred_check_branch
          %1159 = sbr.rel (%p1157) target = $region166
        $region165: #{tpu_custom_call.1} parent=137 // pred_region
          %1161 = dma.done [#allocation6], 16
        $region166: #{tpu_custom_call.1} parent=137 // pred_fallthru
          _
        // Predicated region
        $region167: #{tpu_custom_call.1} parent=137 // pred_check
          %p1162 = pneg %p174
        $region168: #{tpu_custom_call.1} parent=137 // pred_check_branch
          %1164 = sbr.rel (%p1162) target = $region170
        $region169: #{tpu_custom_call.1} parent=137 // pred_region
          %1166 = dma.done [#allocation8], 16
        $region170: #{tpu_custom_call.1} parent=137 // pred_fallthru
          _
      $region138: #{tpu_custom_call.1} parent=5 // pred_fallthru
        _
      %p1167 = scmp.le.s32.totalorder 2, %s14
      // Predicated region
      $region171: #{tpu_custom_call.1} parent=5 // pred_check
        %p1168 = pneg %p1167
      $region172: #{tpu_custom_call.1} parent=5 // pred_check_branch
        %1170 = sbr.rel (%p1168) target = $region174
      $region173: #{tpu_custom_call.1} parent=5 // pred_region
        %s1171 = ssub.s32 %s14, 2
      $region174: #{tpu_custom_call.1} parent=5 // pred_fallthru
        _
    $region6: #{tpu_custom_call.1} parent=1 // loop_footer
      %s18 = sadd.s32 1, %s14
    $region7: #{tpu_custom_call.1} parent=1 // loop_footer_branch
      %13 = sbr.rel target = $region3
    $region8: #{tpu_custom_call.1} parent=1 // loop_exit
      _
    %1172 = vsyncpa [#allocation6], 1
    %s1173 = scalar_lea.sflag [#allocation6], 1
    %1174 = vsyncpa %s1173, 1
    %1175 = vsyncpa [#allocation8], 1

</llo_original>
